<compile_context>
chip_gen: v5e
topology: v5e:2x2
jax: 0.10.0
libtpu: 0.0.40
codegen_flags: <defaults>
</compile_context>

<pallas_src>
import functools

import jax
import jax.numpy as jnp
import numpy as np
from jax.experimental import pallas as pl
from jax.experimental.pallas import tpu as pltpu

# Scoped-VMEM budget: 48 MiB is safe on every generation (v7x TensorCore has
# 64 MiB physical, v5e/v6e have 128 MiB) and far above this kernel's
# worst-case footprint.  Tile selection additionally caps the double-buffered
# footprint against _VMEM_BUDGET, so the same code never hits the v7x cliff.
_VMEM_LIMIT = 48 * 1024 * 1024
_VMEM_BUDGET = 40 * 1024 * 1024


# ----------------------------------------------------------------------------- #
# Helpers
# ----------------------------------------------------------------------------- #
def _pick_tile(dim, target, align):
    """Largest tile <= target that is a multiple of `align` and divides `dim`.
    Returns the full dim (single block) for small / non-factorable dims."""
    if dim <= target:
        return dim
    t = (target // align) * align
    while t >= align:
        if dim % t == 0:
            return t
        t -= align
    return dim  # fallback: single block along this dim


# ----------------------------------------------------------------------------- #
# Linear (MXU) kernels
# ----------------------------------------------------------------------------- #
def _linear_wres_kernel(x_ref, w_ref, o_ref):
    # Weight-resident: full K and full Nout in one block, no reduction axis.
    o_ref[...] = jnp.dot(x_ref[...], w_ref[...],
                         preferred_element_type=jnp.float32).astype(o_ref.dtype)


def _linear_wres_bias_kernel(x_ref, w_ref, b_ref, o_ref):
    acc = jnp.dot(x_ref[...], w_ref[...], preferred_element_type=jnp.float32)
    o_ref[...] = (acc + b_ref[...]).astype(o_ref.dtype)


def _matmul_kernel(x_ref, w_ref, o_ref, acc_ref):
    @pl.when(pl.program_id(2) == 0)
    def _init():
        acc_ref[...] = jnp.zeros_like(acc_ref)

    acc_ref[...] += jnp.dot(x_ref[...], w_ref[...],
                            preferred_element_type=jnp.float32)

    @pl.when(pl.program_id(2) == pl.num_programs(2) - 1)
    def _done():
        o_ref[...] = acc_ref[...].astype(o_ref.dtype)


def _matmul_bias_kernel(x_ref, w_ref, b_ref, o_ref, acc_ref):
    @pl.when(pl.program_id(2) == 0)
    def _init():
        acc_ref[...] = jnp.zeros_like(acc_ref)

    acc_ref[...] += jnp.dot(x_ref[...], w_ref[...],
                            preferred_element_type=jnp.float32)

    @pl.when(pl.program_id(2) == pl.num_programs(2) - 1)
    def _done():
        o_ref[...] = (acc_ref[...] + b_ref[...]).astype(o_ref.dtype)


def linear_pallas(x2d, w_t, b=None, *, compute_dtype=jnp.bfloat16,
                  out_dtype=jnp.float32, tm_target=512, tn=256, tk=256):
    """y = x2d @ w_t (+ b).  w_t is already (K, Nout), i.e. torch weight.T."""
    M, K = x2d.shape
    Nout = w_t.shape[1]

    x2d = x2d.astype(compute_dtype)
    w_t = w_t.astype(compute_dtype)
    itemsize = jnp.dtype(compute_dtype).itemsize
    out_itemsize = jnp.dtype(out_dtype).itemsize
    w_bytes = K * Nout * itemsize

    # ---------------- weight-resident path (the GPSA case) ---------------- #
    if w_bytes <= 4 * 1024 * 1024:
        align = 16 if itemsize < 4 else 8           # bf16 sublane packing
        tm = min(M, tm_target)
        if tm < M:
            tm = max(align, (tm // align) * align)

        def _footprint(t):
            return (2 * t * K * itemsize            # x (double-buffered)
                    + 2 * w_bytes                    # weight (worst case 2x)
                    + 2 * t * Nout * out_itemsize    # out (double-buffered)
                    + t * Nout * 4)                  # f32 headroom

        while tm > align and _footprint(tm) > _VMEM_BUDGET:
            tm = max(align, tm - align)

        grid = (pl.cdiv(M, tm),)                     # partial last M block is OK
        in_specs = [
            pl.BlockSpec((tm, K), lambda i: (i, 0)),
            pl.BlockSpec((K, Nout), lambda i: (0, 0)),   # constant -> fetched once
        ]
        operands = [x2d, w_t]
        kernel = _linear_wres_kernel
        if b is not None:
            in_specs.append(pl.BlockSpec((1, Nout), lambda i: (0, 0)))
            operands.append(b.reshape(1, Nout).astype(jnp.float32))
            kernel = _linear_wres_bias_kernel

        return pl.pallas_call(
            kernel,
            out_shape=jax.ShapeDtypeStruct((M, Nout), out_dtype),
            grid=grid,
            in_specs=in_specs,
            out_specs=pl.BlockSpec((tm, Nout), lambda i: (i, 0)),
            compiler_params=pltpu.CompilerParams(
                dimension_semantics=("parallel",),
                vmem_limit_bytes=_VMEM_LIMIT,
            ),
        )(*operands)

    # ---------------- fallback: K/N tiled with f32 accumulator ------------ #
    tm = _pick_tile(M, tm_target, 8)
    tn = _pick_tile(Nout, tn, 128)
    tk = _pick_tile(K, tk, 128)
    grid = (M // tm, Nout // tn, K // tk)

    in_specs = [
        pl.BlockSpec((tm, tk), lambda i, j, k: (i, k)),
        pl.BlockSpec((tk, tn), lambda i, j, k: (k, j)),
    ]
    operands = [x2d, w_t]
    kernel = _matmul_kernel
    if b is not None:
        in_specs.append(pl.BlockSpec((1, tn), lambda i, j, k: (0, j)))
        operands.append(b.reshape(1, Nout).astype(jnp.float32))
        kernel = _matmul_bias_kernel

    return pl.pallas_call(
        kernel,
        out_shape=jax.ShapeDtypeStruct((M, Nout), out_dtype),
        grid=grid,
        in_specs=in_specs,
        out_specs=pl.BlockSpec((tm, tn), lambda i, j, k: (i, j)),
        scratch_shapes=[pltpu.VMEM((tm, tn), jnp.float32)],
        compiler_params=pltpu.CompilerParams(
            dimension_semantics=("parallel", "parallel", "arbitrary"),
            vmem_limit_bytes=_VMEM_LIMIT,
        ),
    )(*operands)


# ----------------------------------------------------------------------------- #
# Gated positional attention kernel (one batch element / grid step, all heads)
# ----------------------------------------------------------------------------- #
def _gpsa_attn_kernel(gate_ref, qk_ref, v_ref, pos_ref, o_ref, acc_ref, *,
                      num_heads, head_dim, scale, approx_recip):
    # gate_ref: SMEM (H,) f32 = sigmoid(gating)
    # qk_ref:   (1, N, 2C)  q = [:, :C], k = [:, C:2C], head h -> lanes [h*D,(h+1)*D)
    # v_ref:    (1, N, C)
    # pos_ref:  (H, N, N)   softmax-normalized (batch independent, hoisted)
    # o_ref:    (1, N, C)   merged-heads output slab (single lane-dense store)
    # acc_ref:  (N, C) f32 VMEM scratch (per-head results, short live ranges)
    C = num_heads * head_dim

    def _recip(x):
        if approx_recip:
            return pl.reciprocal(x, approx=True)   # EUP slot, ~free vs VALU
        return 1.0 / x

    for h in range(num_heads):                      # H small & static -> unrolled
        lo = h * head_dim
        q = qk_ref[0, :, lo:lo + head_dim] * scale                 # pre-scaled (N,D)
        k = qk_ref[0, :, C + lo:C + lo + head_dim]                 # (N, D)
        v = v_ref[0, :, lo:lo + head_dim]                          # (N, D)

        # q @ k^T via dot_general (contract D of both; no explicit transpose).
        s = jax.lax.dot_general(
            q, k, (((1,), (1,)), ((), ())),
            preferred_element_type=jnp.float32)                    # (N, N) f32

        # Softmax in f32 (v5e has no bf16 VPU/EUP).
        s = s - jnp.max(s, axis=-1, keepdims=True)
        p = jnp.exp(s)
        patch = p * _recip(jnp.sum(p, axis=-1, keepdims=True))

        g = gate_ref[h]                                            # f32 scalar
        attn = (1.0 - g) * patch + g * pos_ref[h].astype(jnp.float32)
        # Renormalization (matches reference; row sums are ~1 so this is ~no-op).
        attn = attn * _recip(jnp.sum(attn, axis=-1, keepdims=True))

        acc_ref[:, lo:lo + head_dim] = jnp.dot(
            attn.astype(v.dtype), v, preferred_element_type=jnp.float32)

    # Single lane-dense (N, C) store, one final cast.
    o_ref[0] = acc_ref[...].astype(o_ref.dtype)


def gpsa_attn_pallas(qk, v, pos_sm, gate_sig, *, num_heads, scale,
                     compute_dtype=jnp.bfloat16, out_dtype=None):
    """qk: (B,N,2C), v: (B,N,C), pos_sm: (H,N,N), gate_sig: (H,) -> (B,N,C)."""
    B, N, C2 = qk.shape
    C = C2 // 2
    H = num_heads
    D = C // H
    if out_dtype is None:
        out_dtype = compute_dtype

    qk = qk.astype(compute_dtype)
    v = v.astype(compute_dtype)
    pos_sm = pos_sm.astype(compute_dtype)   # bf16 halves pos VMEM residency
    approx = jnp.dtype(compute_dtype) != jnp.dtype(jnp.float32)

    kernel = functools.partial(
        _gpsa_attn_kernel, num_heads=H, head_dim=D, scale=float(scale),
        approx_recip=bool(approx))

    # TODO(synk): head-major (B, 2, H, N, D) q/k/v layout would remove the
    # non-128-aligned in-kernel lane slices at the cost of an extra host-side
    # transpose pass; not worth it until profiling shows XLU pressure here.
    return pl.pallas_call(
        kernel,
        out_shape=jax.ShapeDtypeStruct((B, N, C), out_dtype),
        grid=(B,),
        in_specs=[
            pl.BlockSpec(memory_space=pltpu.MemorySpace.SMEM),     # sigmoid(gating)
            pl.BlockSpec((1, N, 2 * C), lambda b: (b, 0, 0)),      # qk
            pl.BlockSpec((1, N, C), lambda b: (b, 0, 0)),          # v
            pl.BlockSpec((H, N, N), lambda b: (0, 0, 0)),          # pos softmax (constant)
        ],
        out_specs=pl.BlockSpec((1, N, C), lambda b: (b, 0, 0)),
        scratch_shapes=[pltpu.VMEM((N, C), jnp.float32)],
        compiler_params=pltpu.CompilerParams(
            dimension_semantics=("parallel",),     # batch axis -> megacore on v7x
            vmem_limit_bytes=_VMEM_LIMIT,
        ),
    )(gate_sig.astype(jnp.float32), qk, v, pos_sm)


# ----------------------------------------------------------------------------- #
# Parameters / rel_indices (host-side, mirrors the PyTorch init)
# ----------------------------------------------------------------------------- #
def init_gpsa_params(key, dim, num_heads, locality_strength=1.0):
    k1, k2, k3 = jax.random.split(key, 3)
    std = 0.02
    # Weights stored PRE-TRANSPOSED ((in, out) = torch W.T): no per-forward
    # transpose / extra HBM copy.
    params = {
        "Wqk_t": jnp.transpose(
            jax.random.normal(k1, (2 * dim, dim), jnp.float32) * std),  # (C, 2C)
        "Wv_t": jnp.eye(dim, dtype=jnp.float32),                        # local_init
        "Wproj_t": jnp.transpose(
            jax.random.normal(k2, (dim, dim), jnp.float32) * std),      # (C, C)
        "bproj": jnp.zeros((dim,), jnp.float32),
        "bpos": jnp.zeros((num_heads,), jnp.float32),
        "gating": jnp.ones((num_heads,), jnp.float32),
    }
    # pos_proj local init (mirrors GPSA.local_init) -- build in writable numpy.
    wpos = np.array(jax.random.normal(k3, (num_heads, 3), jnp.float32)) * std
    ks = int(num_heads ** 0.5)
    center = (ks - 1) / 2 if ks % 2 == 0 else ks // 2
    locality_distance = 1
    for h1 in range(ks):
        for h2 in range(ks):
            position = h1 + ks * h2
            wpos[position, 2] = -1.0
            wpos[position, 1] = 2.0 * (h1 - center) * locality_distance
            wpos[position, 0] = 2.0 * (h2 - center) * locality_distance
    wpos *= locality_strength
    params["Wpos"] = jnp.asarray(wpos, jnp.float32)                     # (H, 3)
    return params


def get_rel_indices(num_patches):
    img_size = int(num_patches ** 0.5)
    ind = jnp.arange(img_size)[None, :] - jnp.arange(img_size)[:, None]   # (s, s)
    indx = jnp.tile(ind, (img_size, img_size))                            # (N, N)
    indy = jnp.repeat(jnp.repeat(ind, img_size, axis=0), img_size, axis=1)
    indd = indx ** 2 + indy ** 2
    rel = jnp.stack([indx, indy, indd], axis=-1).astype(jnp.float32)      # (N, N, 3)
    return rel[None]                                                      # (1, N, N, 3)


# ----------------------------------------------------------------------------- #
# Forward
# ----------------------------------------------------------------------------- #
def gpsa_forward(params, x, num_heads, compute_dtype=jnp.bfloat16):
    B, N, C = x.shape
    H = num_heads
    D = C // H
    scale = float(D) ** -0.5                       # static (shape-derived)

    x2d = x.reshape(B * N, C)

    # qk / v projections (qkv_bias=False -> no bias add at all).  Intermediates
    # stay in compute_dtype (bf16 by default) to halve HBM traffic into the
    # attention kernel and the proj GEMM.
    qk = linear_pallas(x2d, params["Wqk_t"], compute_dtype=compute_dtype,
                       out_dtype=compute_dtype).reshape(B, N, 2 * C)
    v = linear_pallas(x2d, params["Wv_t"], compute_dtype=compute_dtype,
                      out_dtype=compute_dtype).reshape(B, N, C)

    # Positional attention: (N*N, 3) @ (3, H) is far too skinny for the MXU --
    # compute it (and its batch-independent softmax) once in plain XLA.
    rel = get_rel_indices(N)[0]                                        # (N, N, 3)
    pos_logits = jnp.einsum("nmt,ht->hnm", rel, params["Wpos"]) \
        + params["bpos"][:, None, None]                                # (H, N, N)
    pos_sm = jax.nn.softmax(pos_logits, axis=-1)

    gate_sig = jax.nn.sigmoid(params["gating"])                        # (H,)

    # Gated attention + attn @ v (hot path, Pallas). Output is already (B,N,C)
    # with heads merged -> feeds proj directly, no host transpose.
    out = gpsa_attn_pallas(qk, v, pos_sm, gate_sig, num_heads=H, scale=scale,
                           compute_dtype=compute_dtype,
                           out_dtype=compute_dtype)                    # (B, N, C)

    out = linear_pallas(out.reshape(B * N, C), params["Wproj_t"],
                        params["bproj"], compute_dtype=compute_dtype,
                        out_dtype=jnp.float32)
    # attn_drop / proj_drop are identity in eval mode (p = 0.0)
    return out.reshape(B, N, C)


# ----------------------------------------------------------------------------- #
# Pure-JAX reference (mirrors the PyTorch forward) for verification
# ----------------------------------------------------------------------------- #
def gpsa_reference(params, x, num_heads):
    B, N, C = x.shape
    H = num_heads
    D = C // H
    scale = float(D) ** -0.5

    qk = (x @ params["Wqk_t"]).reshape(B, N, 2, H, D).transpose(2, 0, 3, 1, 4)
    q, k = qk[0], qk[1]
    v = (x @ params["Wv_t"]).reshape(B, N, H, D).transpose(0, 2, 1, 3)

    rel = get_rel_indices(N)                                           # (1,N,N,3)
    pos_score = rel @ params["Wpos"].T + params["bpos"]                # (1,N,N,H)
    pos_score = jnp.broadcast_to(pos_score, (B, N, N, H)).transpose(0, 3, 1, 2)

    patch = jax.nn.softmax(q @ jnp.swapaxes(k, -2, -1) * scale, axis=-1)
    pos = jax.nn.softmax(pos_score, axis=-1)
    g = jax.nn.sigmoid(params["gating"]).reshape(1, H, 1, 1)
    attn = (1.0 - g) * patch + g * pos
    attn = attn / attn.sum(axis=-1, keepdims=True)

    out = (attn @ v).transpose(0, 2, 1, 3).reshape(B, N, C)
    out = out @ params["Wproj_t"] + params["bproj"]
    return out


# ----------------------------------------------------------------------------- #
if __name__ == "__main__":
    B = 2
    N = 16           # num_patches (4x4 image grid)
    DIM = 32
    NUM_HEADS = 4    # perfect square -> local_init covers every head

    key = jax.random.PRNGKey(0)
    pkey, xkey = jax.random.split(key)
    params = init_gpsa_params(pkey, DIM, NUM_HEADS, locality_strength=1.0)
    x = jax.random.normal(xkey, (B, N, DIM), jnp.float32)

    fwd = jax.jit(gpsa_forward, static_argnums=(2, 3))
    ref = gpsa_reference(params, x, NUM_HEADS)

    # Tight check on the f32 path (exact divides, f32 MXU).
    out_f32 = jax.block_until_ready(fwd(params, x, NUM_HEADS, jnp.float32))
    np.testing.assert_allclose(np.asarray(out_f32), np.asarray(ref),
                               atol=1e-4, rtol=1e-4)

    # Production bf16 path (bf16 MXU inputs, f32 accumulation, approx recip).
    out_bf16 = jax.block_until_ready(fwd(params, x, NUM_HEADS, jnp.bfloat16))
    np.testing.assert_allclose(np.asarray(out_bf16, dtype=np.float32),
                               np.asarray(ref), atol=2e-2, rtol=2e-2)

    print("KERNEL_OK")
</pallas_src>

<mosaic_0001>
module attributes {stable_mosaic.version = 11 : i64} {
  func.func @_gpsa_attn_kernel(%arg0: i32, %arg1: memref<4xf32, #tpu.memory_space<smem>>, %arg2: memref<1x16x64xf32, #tpu.memory_space<vmem>>, %arg3: memref<1x16x32xf32, #tpu.memory_space<vmem>>, %arg4: memref<4x16x16xf32, #tpu.memory_space<vmem>>, %arg5: memref<1x16x32xf32, #tpu.memory_space<vmem>>, %arg6: memref<16x32xf32, #tpu.memory_space<vmem>>) attributes {dimension_semantics = [#tpu.dimension_semantics<parallel>], iteration_bounds = array<i64: 2>, scalar_prefetch = 0 : i64, scratch_operands = 1 : i64, tpu.core_type = #tpu.core_type<tc>, window_params = [{transform_indices = @transform_0, window_bounds = array<i64: 4>}, {transform_indices = @transform_1, window_bounds = array<i64: 1, 16, 64>}, {transform_indices = @transform_2, window_bounds = array<i64: 1, 16, 32>}, {pipeline_mode = #tpu.pipeline_mode<synchronous>, transform_indices = @transform_3, window_bounds = array<i64: 4, 16, 16>}, {transform_indices = @transform_4, window_bounds = array<i64: 1, 16, 32>}]} {
    %c0 = arith.constant 0 : index
    %c0_0 = arith.constant 0 : index
    %c0_1 = arith.constant 0 : index
    %0 = vector.load %arg2[%c0, %c0_0, %c0_1] : memref<1x16x64xf32, #tpu.memory_space<vmem>>, vector<1x16x8xf32>
    %1 = vector.shape_cast %0 : vector<1x16x8xf32> to vector<16x8xf32>
    %cst = arith.constant 0.353553385 : f32
    %2 = vector.broadcast %cst : f32 to vector<16x8xf32>
    %3 = arith.mulf %1, %2 : vector<16x8xf32>
    %c0_2 = arith.constant 0 : index
    %c0_3 = arith.constant 0 : index
    %c32 = arith.constant 32 : index
    %4 = vector.load %arg2[%c0_2, %c0_3, %c32] : memref<1x16x64xf32, #tpu.memory_space<vmem>>, vector<1x16x8xf32>
    %5 = vector.shape_cast %4 : vector<1x16x8xf32> to vector<16x8xf32>
    %c0_4 = arith.constant 0 : index
    %c0_5 = arith.constant 0 : index
    %c0_6 = arith.constant 0 : index
    %6 = vector.load %arg3[%c0_4, %c0_5, %c0_6] : memref<1x16x32xf32, #tpu.memory_space<vmem>>, vector<1x16x8xf32>
    %7 = vector.shape_cast %6 : vector<1x16x8xf32> to vector<16x8xf32>
    %cst_7 = arith.constant dense<0.000000e+00> : vector<16x16xf32>
    %8 = tpu.matmul %3, %5, %cst_7 {dimension_numbers = #tpu.dot_dimension_numbers<[1], [1], [0], [0], [0, 0, 1, 0], [], []>} : vector<16x8xf32>, vector<16x8xf32>, vector<16x16xf32> -> vector<16x16xf32>
    %cst_8 = arith.constant dense<0xFF800000> : vector<16xf32>
    %9 = vector.multi_reduction <maximumf>, %8, %cst_8 [1] : vector<16x16xf32> to vector<16xf32>
    %10 = vector.shape_cast %9 : vector<16xf32> to vector<16x1xf32>
    %11 = vector.broadcast %10 : vector<16x1xf32> to vector<16x16xf32>
    %12 = arith.subf %8, %11 : vector<16x16xf32>
    %13 = math.exp %12 : vector<16x16xf32>
    %cst_9 = arith.constant dense<0.000000e+00> : vector<16xf32>
    %14 = vector.multi_reduction <add>, %13, %cst_9 [1] : vector<16x16xf32> to vector<16xf32>
    %15 = vector.shape_cast %14 : vector<16xf32> to vector<16x1xf32>
    %cst_10 = arith.constant 1.000000e+00 : f32
    %16 = vector.broadcast %cst_10 : f32 to vector<16x1xf32>
    %17 = arith.divf %16, %15 : vector<16x1xf32>
    %18 = vector.broadcast %17 : vector<16x1xf32> to vector<16x16xf32>
    %19 = arith.mulf %13, %18 : vector<16x16xf32>
    %c0_11 = arith.constant 0 : index
    %20 = memref.load %arg1[%c0_11] : memref<4xf32, #tpu.memory_space<smem>>
    %cst_12 = arith.constant 1.000000e+00 : f32
    %21 = arith.subf %cst_12, %20 : f32
    %22 = vector.broadcast %21 : f32 to vector<16x16xf32>
    %23 = arith.mulf %22, %19 : vector<16x16xf32>
    %c0_13 = arith.constant 0 : index
    %c0_14 = arith.constant 0 : index
    %c0_15 = arith.constant 0 : index
    %24 = vector.load %arg4[%c0_13, %c0_14, %c0_15] : memref<4x16x16xf32, #tpu.memory_space<vmem>>, vector<1x16x16xf32>
    %25 = vector.shape_cast %24 : vector<1x16x16xf32> to vector<16x16xf32>
    %26 = vector.broadcast %20 : f32 to vector<16x16xf32>
    %27 = arith.mulf %26, %25 : vector<16x16xf32>
    %28 = arith.addf %23, %27 : vector<16x16xf32>
    %cst_16 = arith.constant dense<0.000000e+00> : vector<16xf32>
    %29 = vector.multi_reduction <add>, %28, %cst_16 [1] : vector<16x16xf32> to vector<16xf32>
    %30 = vector.shape_cast %29 : vector<16xf32> to vector<16x1xf32>
    %cst_17 = arith.constant 1.000000e+00 : f32
    %31 = vector.broadcast %cst_17 : f32 to vector<16x1xf32>
    %32 = arith.divf %31, %30 : vector<16x1xf32>
    %33 = vector.broadcast %32 : vector<16x1xf32> to vector<16x16xf32>
    %34 = arith.mulf %28, %33 : vector<16x16xf32>
    %cst_18 = arith.constant dense<0.000000e+00> : vector<16x8xf32>
    %35 = tpu.matmul %34, %7, %cst_18 {dimension_numbers = #tpu.dot_dimension_numbers<[1], [0], [0], [1], [0, 0, 1, 1], [], []>} : vector<16x16xf32>, vector<16x8xf32>, vector<16x8xf32> -> vector<16x8xf32>
    %c0_19 = arith.constant 0 : index
    %c0_20 = arith.constant 0 : index
    %36 = vector.load %arg6[%c0_19, %c0_20] : memref<16x32xf32, #tpu.memory_space<vmem>>, vector<16x8xf32>
    tpu.vector_store %arg6[%c0_19, %c0_20], %35 {strides = array<i32>} : memref<16x32xf32, #tpu.memory_space<vmem>>, vector<16x8xf32>,
    %c0_21 = arith.constant 0 : index
    %c0_22 = arith.constant 0 : index
    %c8 = arith.constant 8 : index
    %37 = vector.load %arg2[%c0_21, %c0_22, %c8] : memref<1x16x64xf32, #tpu.memory_space<vmem>>, vector<1x16x8xf32>
    %38 = vector.shape_cast %37 : vector<1x16x8xf32> to vector<16x8xf32>
    %cst_23 = arith.constant 0.353553385 : f32
    %39 = vector.broadcast %cst_23 : f32 to vector<16x8xf32>
    %40 = arith.mulf %38, %39 : vector<16x8xf32>
    %c0_24 = arith.constant 0 : index
    %c0_25 = arith.constant 0 : index
    %c40 = arith.constant 40 : index
    %41 = vector.load %arg2[%c0_24, %c0_25, %c40] : memref<1x16x64xf32, #tpu.memory_space<vmem>>, vector<1x16x8xf32>
    %42 = vector.shape_cast %41 : vector<1x16x8xf32> to vector<16x8xf32>
    %c0_26 = arith.constant 0 : index
    %c0_27 = arith.constant 0 : index
    %c8_28 = arith.constant 8 : index
    %43 = vector.load %arg3[%c0_26, %c0_27, %c8_28] : memref<1x16x32xf32, #tpu.memory_space<vmem>>, vector<1x16x8xf32>
    %44 = vector.shape_cast %43 : vector<1x16x8xf32> to vector<16x8xf32>
    %cst_29 = arith.constant dense<0.000000e+00> : vector<16x16xf32>
    %45 = tpu.matmul %40, %42, %cst_29 {dimension_numbers = #tpu.dot_dimension_numbers<[1], [1], [0], [0], [0, 0, 1, 0], [], []>} : vector<16x8xf32>, vector<16x8xf32>, vector<16x16xf32> -> vector<16x16xf32>
    %cst_30 = arith.constant dense<0xFF800000> : vector<16xf32>
    %46 = vector.multi_reduction <maximumf>, %45, %cst_30 [1] : vector<16x16xf32> to vector<16xf32>
    %47 = vector.shape_cast %46 : vector<16xf32> to vector<16x1xf32>
    %48 = vector.broadcast %47 : vector<16x1xf32> to vector<16x16xf32>
    %49 = arith.subf %45, %48 : vector<16x16xf32>
    %50 = math.exp %49 : vector<16x16xf32>
    %cst_31 = arith.constant dense<0.000000e+00> : vector<16xf32>
    %51 = vector.multi_reduction <add>, %50, %cst_31 [1] : vector<16x16xf32> to vector<16xf32>
    %52 = vector.shape_cast %51 : vector<16xf32> to vector<16x1xf32>
    %cst_32 = arith.constant 1.000000e+00 : f32
    %53 = vector.broadcast %cst_32 : f32 to vector<16x1xf32>
    %54 = arith.divf %53, %52 : vector<16x1xf32>
    %55 = vector.broadcast %54 : vector<16x1xf32> to vector<16x16xf32>
    %56 = arith.mulf %50, %55 : vector<16x16xf32>
    %c1 = arith.constant 1 : index
    %57 = memref.load %arg1[%c1] : memref<4xf32, #tpu.memory_space<smem>>
    %cst_33 = arith.constant 1.000000e+00 : f32
    %58 = arith.subf %cst_33, %57 : f32
    %59 = vector.broadcast %58 : f32 to vector<16x16xf32>
    %60 = arith.mulf %59, %56 : vector<16x16xf32>
    %c1_34 = arith.constant 1 : index
    %c0_35 = arith.constant 0 : index
    %c0_36 = arith.constant 0 : index
    %61 = vector.load %arg4[%c1_34, %c0_35, %c0_36] : memref<4x16x16xf32, #tpu.memory_space<vmem>>, vector<1x16x16xf32>
    %62 = vector.shape_cast %61 : vector<1x16x16xf32> to vector<16x16xf32>
    %63 = vector.broadcast %57 : f32 to vector<16x16xf32>
    %64 = arith.mulf %63, %62 : vector<16x16xf32>
    %65 = arith.addf %60, %64 : vector<16x16xf32>
    %cst_37 = arith.constant dense<0.000000e+00> : vector<16xf32>
    %66 = vector.multi_reduction <add>, %65, %cst_37 [1] : vector<16x16xf32> to vector<16xf32>
    %67 = vector.shape_cast %66 : vector<16xf32> to vector<16x1xf32>
    %cst_38 = arith.constant 1.000000e+00 : f32
    %68 = vector.broadcast %cst_38 : f32 to vector<16x1xf32>
    %69 = arith.divf %68, %67 : vector<16x1xf32>
    %70 = vector.broadcast %69 : vector<16x1xf32> to vector<16x16xf32>
    %71 = arith.mulf %65, %70 : vector<16x16xf32>
    %cst_39 = arith.constant dense<0.000000e+00> : vector<16x8xf32>
    %72 = tpu.matmul %71, %44, %cst_39 {dimension_numbers = #tpu.dot_dimension_numbers<[1], [0], [0], [1], [0, 0, 1, 1], [], []>} : vector<16x16xf32>, vector<16x8xf32>, vector<16x8xf32> -> vector<16x8xf32>
    %c0_40 = arith.constant 0 : index
    %c8_41 = arith.constant 8 : index
    %73 = vector.load %arg6[%c0_40, %c8_41] : memref<16x32xf32, #tpu.memory_space<vmem>>, vector<16x8xf32>
    tpu.vector_store %arg6[%c0_40, %c8_41], %72 {strides = array<i32>} : memref<16x32xf32, #tpu.memory_space<vmem>>, vector<16x8xf32>,
    %c0_42 = arith.constant 0 : index
    %c0_43 = arith.constant 0 : index
    %c16 = arith.constant 16 : index
    %74 = vector.load %arg2[%c0_42, %c0_43, %c16] : memref<1x16x64xf32, #tpu.memory_space<vmem>>, vector<1x16x8xf32>
    %75 = vector.shape_cast %74 : vector<1x16x8xf32> to vector<16x8xf32>
    %cst_44 = arith.constant 0.353553385 : f32
    %76 = vector.broadcast %cst_44 : f32 to vector<16x8xf32>
    %77 = arith.mulf %75, %76 : vector<16x8xf32>
    %c0_45 = arith.constant 0 : index
    %c0_46 = arith.constant 0 : index
    %c48 = arith.constant 48 : index
    %78 = vector.load %arg2[%c0_45, %c0_46, %c48] : memref<1x16x64xf32, #tpu.memory_space<vmem>>, vector<1x16x8xf32>
    %79 = vector.shape_cast %78 : vector<1x16x8xf32> to vector<16x8xf32>
    %c0_47 = arith.constant 0 : index
    %c0_48 = arith.constant 0 : index
    %c16_49 = arith.constant 16 : index
    %80 = vector.load %arg3[%c0_47, %c0_48, %c16_49] : memref<1x16x32xf32, #tpu.memory_space<vmem>>, vector<1x16x8xf32>
    %81 = vector.shape_cast %80 : vector<1x16x8xf32> to vector<16x8xf32>
    %cst_50 = arith.constant dense<0.000000e+00> : vector<16x16xf32>
    %82 = tpu.matmul %77, %79, %cst_50 {dimension_numbers = #tpu.dot_dimension_numbers<[1], [1], [0], [0], [0, 0, 1, 0], [], []>} : vector<16x8xf32>, vector<16x8xf32>, vector<16x16xf32> -> vector<16x16xf32>
    %cst_51 = arith.constant dense<0xFF800000> : vector<16xf32>
    %83 = vector.multi_reduction <maximumf>, %82, %cst_51 [1] : vector<16x16xf32> to vector<16xf32>
    %84 = vector.shape_cast %83 : vector<16xf32> to vector<16x1xf32>
    %85 = vector.broadcast %84 : vector<16x1xf32> to vector<16x16xf32>
    %86 = arith.subf %82, %85 : vector<16x16xf32>
    %87 = math.exp %86 : vector<16x16xf32>
    %cst_52 = arith.constant dense<0.000000e+00> : vector<16xf32>
    %88 = vector.multi_reduction <add>, %87, %cst_52 [1] : vector<16x16xf32> to vector<16xf32>
    %89 = vector.shape_cast %88 : vector<16xf32> to vector<16x1xf32>
    %cst_53 = arith.constant 1.000000e+00 : f32
    %90 = vector.broadcast %cst_53 : f32 to vector<16x1xf32>
    %91 = arith.divf %90, %89 : vector<16x1xf32>
    %92 = vector.broadcast %91 : vector<16x1xf32> to vector<16x16xf32>
    %93 = arith.mulf %87, %92 : vector<16x16xf32>
    %c2 = arith.constant 2 : index
    %94 = memref.load %arg1[%c2] : memref<4xf32, #tpu.memory_space<smem>>
    %cst_54 = arith.constant 1.000000e+00 : f32
    %95 = arith.subf %cst_54, %94 : f32
    %96 = vector.broadcast %95 : f32 to vector<16x16xf32>
    %97 = arith.mulf %96, %93 : vector<16x16xf32>
    %c2_55 = arith.constant 2 : index
    %c0_56 = arith.constant 0 : index
    %c0_57 = arith.constant 0 : index
    %98 = vector.load %arg4[%c2_55, %c0_56, %c0_57] : memref<4x16x16xf32, #tpu.memory_space<vmem>>, vector<1x16x16xf32>
    %99 = vector.shape_cast %98 : vector<1x16x16xf32> to vector<16x16xf32>
    %100 = vector.broadcast %94 : f32 to vector<16x16xf32>
    %101 = arith.mulf %100, %99 : vector<16x16xf32>
    %102 = arith.addf %97, %101 : vector<16x16xf32>
    %cst_58 = arith.constant dense<0.000000e+00> : vector<16xf32>
    %103 = vector.multi_reduction <add>, %102, %cst_58 [1] : vector<16x16xf32> to vector<16xf32>
    %104 = vector.shape_cast %103 : vector<16xf32> to vector<16x1xf32>
    %cst_59 = arith.constant 1.000000e+00 : f32
    %105 = vector.broadcast %cst_59 : f32 to vector<16x1xf32>
    %106 = arith.divf %105, %104 : vector<16x1xf32>
    %107 = vector.broadcast %106 : vector<16x1xf32> to vector<16x16xf32>
    %108 = arith.mulf %102, %107 : vector<16x16xf32>
    %cst_60 = arith.constant dense<0.000000e+00> : vector<16x8xf32>
    %109 = tpu.matmul %108, %81, %cst_60 {dimension_numbers = #tpu.dot_dimension_numbers<[1], [0], [0], [1], [0, 0, 1, 1], [], []>} : vector<16x16xf32>, vector<16x8xf32>, vector<16x8xf32> -> vector<16x8xf32>
    %c0_61 = arith.constant 0 : index
    %c16_62 = arith.constant 16 : index
    %110 = vector.load %arg6[%c0_61, %c16_62] : memref<16x32xf32, #tpu.memory_space<vmem>>, vector<16x8xf32>
    tpu.vector_store %arg6[%c0_61, %c16_62], %109 {strides = array<i32>} : memref<16x32xf32, #tpu.memory_space<vmem>>, vector<16x8xf32>,
    %c0_63 = arith.constant 0 : index
    %c0_64 = arith.constant 0 : index
    %c24 = arith.constant 24 : index
    %111 = vector.load %arg2[%c0_63, %c0_64, %c24] : memref<1x16x64xf32, #tpu.memory_space<vmem>>, vector<1x16x8xf32>
    %112 = vector.shape_cast %111 : vector<1x16x8xf32> to vector<16x8xf32>
    %cst_65 = arith.constant 0.353553385 : f32
    %113 = vector.broadcast %cst_65 : f32 to vector<16x8xf32>
    %114 = arith.mulf %112, %113 : vector<16x8xf32>
    %c0_66 = arith.constant 0 : index
    %c0_67 = arith.constant 0 : index
    %c56 = arith.constant 56 : index
    %115 = vector.load %arg2[%c0_66, %c0_67, %c56] : memref<1x16x64xf32, #tpu.memory_space<vmem>>, vector<1x16x8xf32>
    %116 = vector.shape_cast %115 : vector<1x16x8xf32> to vector<16x8xf32>
    %c0_68 = arith.constant 0 : index
    %c0_69 = arith.constant 0 : index
    %c24_70 = arith.constant 24 : index
    %117 = vector.load %arg3[%c0_68, %c0_69, %c24_70] : memref<1x16x32xf32, #tpu.memory_space<vmem>>, vector<1x16x8xf32>
    %118 = vector.shape_cast %117 : vector<1x16x8xf32> to vector<16x8xf32>
    %cst_71 = arith.constant dense<0.000000e+00> : vector<16x16xf32>
    %119 = tpu.matmul %114, %116, %cst_71 {dimension_numbers = #tpu.dot_dimension_numbers<[1], [1], [0], [0], [0, 0, 1, 0], [], []>} : vector<16x8xf32>, vector<16x8xf32>, vector<16x16xf32> -> vector<16x16xf32>
    %cst_72 = arith.constant dense<0xFF800000> : vector<16xf32>
    %120 = vector.multi_reduction <maximumf>, %119, %cst_72 [1] : vector<16x16xf32> to vector<16xf32>
    %121 = vector.shape_cast %120 : vector<16xf32> to vector<16x1xf32>
    %122 = vector.broadcast %121 : vector<16x1xf32> to vector<16x16xf32>
    %123 = arith.subf %119, %122 : vector<16x16xf32>
    %124 = math.exp %123 : vector<16x16xf32>
    %cst_73 = arith.constant dense<0.000000e+00> : vector<16xf32>
    %125 = vector.multi_reduction <add>, %124, %cst_73 [1] : vector<16x16xf32> to vector<16xf32>
    %126 = vector.shape_cast %125 : vector<16xf32> to vector<16x1xf32>
    %cst_74 = arith.constant 1.000000e+00 : f32
    %127 = vector.broadcast %cst_74 : f32 to vector<16x1xf32>
    %128 = arith.divf %127, %126 : vector<16x1xf32>
    %129 = vector.broadcast %128 : vector<16x1xf32> to vector<16x16xf32>
    %130 = arith.mulf %124, %129 : vector<16x16xf32>
    %c3 = arith.constant 3 : index
    %131 = memref.load %arg1[%c3] : memref<4xf32, #tpu.memory_space<smem>>
    %cst_75 = arith.constant 1.000000e+00 : f32
    %132 = arith.subf %cst_75, %131 : f32
    %133 = vector.broadcast %132 : f32 to vector<16x16xf32>
    %134 = arith.mulf %133, %130 : vector<16x16xf32>
    %c3_76 = arith.constant 3 : index
    %c0_77 = arith.constant 0 : index
    %c0_78 = arith.constant 0 : index
    %135 = vector.load %arg4[%c3_76, %c0_77, %c0_78] : memref<4x16x16xf32, #tpu.memory_space<vmem>>, vector<1x16x16xf32>
    %136 = vector.shape_cast %135 : vector<1x16x16xf32> to vector<16x16xf32>
    %137 = vector.broadcast %131 : f32 to vector<16x16xf32>
    %138 = arith.mulf %137, %136 : vector<16x16xf32>
    %139 = arith.addf %134, %138 : vector<16x16xf32>
    %cst_79 = arith.constant dense<0.000000e+00> : vector<16xf32>
    %140 = vector.multi_reduction <add>, %139, %cst_79 [1] : vector<16x16xf32> to vector<16xf32>
    %141 = vector.shape_cast %140 : vector<16xf32> to vector<16x1xf32>
    %cst_80 = arith.constant 1.000000e+00 : f32
    %142 = vector.broadcast %cst_80 : f32 to vector<16x1xf32>
    %143 = arith.divf %142, %141 : vector<16x1xf32>
    %144 = vector.broadcast %143 : vector<16x1xf32> to vector<16x16xf32>
    %145 = arith.mulf %139, %144 : vector<16x16xf32>
    %cst_81 = arith.constant dense<0.000000e+00> : vector<16x8xf32>
    %146 = tpu.matmul %145, %118, %cst_81 {dimension_numbers = #tpu.dot_dimension_numbers<[1], [0], [0], [1], [0, 0, 1, 1], [], []>} : vector<16x16xf32>, vector<16x8xf32>, vector<16x8xf32> -> vector<16x8xf32>
    %c0_82 = arith.constant 0 : index
    %c24_83 = arith.constant 24 : index
    %147 = vector.load %arg6[%c0_82, %c24_83] : memref<16x32xf32, #tpu.memory_space<vmem>>, vector<16x8xf32>
    tpu.vector_store %arg6[%c0_82, %c24_83], %146 {strides = array<i32>} : memref<16x32xf32, #tpu.memory_space<vmem>>, vector<16x8xf32>,
    %c0_84 = arith.constant 0 : index
    %c0_85 = arith.constant 0 : index
    %148 = vector.load %arg6[%c0_84, %c0_85] : memref<16x32xf32, #tpu.memory_space<vmem>>, vector<16x32xf32>
    %c0_86 = arith.constant 0 : index
    %c0_87 = arith.constant 0 : index
    %c0_88 = arith.constant 0 : index
    %149 = vector.load %arg5[%c0_86, %c0_87, %c0_88] : memref<1x16x32xf32, #tpu.memory_space<vmem>>, vector<1x16x32xf32>
    %150 = vector.shape_cast %149 : vector<1x16x32xf32> to vector<16x32xf32>
    %151 = vector.shape_cast %148 : vector<16x32xf32> to vector<1x16x32xf32>
    tpu.vector_store %arg5[%c0_86, %c0_87, %c0_88], %151 {strides = array<i32>} : memref<1x16x32xf32, #tpu.memory_space<vmem>>, vector<1x16x32xf32>,
    return
  }
  func.func @transform_0(%arg0: i32) -> i32 {
    %c0_i32 = arith.constant 0 : i32
    %c0_i32_0 = arith.constant 0 : i32
    return %c0_i32 : i32
  }
  func.func @transform_1(%arg0: i32) -> (i32, i32, i32) {
    %c0_i32 = arith.constant 0 : i32
    %c0_i32_0 = arith.constant 0 : i32
    %c0_i32_1 = arith.constant 0 : i32
    return %arg0, %c0_i32, %c0_i32_0 : i32, i32, i32
  }
  func.func @transform_2(%arg0: i32) -> (i32, i32, i32) {
    %c0_i32 = arith.constant 0 : i32
    %c0_i32_0 = arith.constant 0 : i32
    %c0_i32_1 = arith.constant 0 : i32
    return %arg0, %c0_i32, %c0_i32_0 : i32, i32, i32
  }
  func.func @transform_3(%arg0: i32) -> (i32, i32, i32) {
    %c0_i32 = arith.constant 0 : i32
    %c0_i32_0 = arith.constant 0 : i32
    %c0_i32_1 = arith.constant 0 : i32
    %c0_i32_2 = arith.constant 0 : i32
    return %c0_i32, %c0_i32_0, %c0_i32_1 : i32, i32, i32
  }
  func.func @transform_4(%arg0: i32) -> (i32, i32, i32) {
    %c0_i32 = arith.constant 0 : i32
    %c0_i32_0 = arith.constant 0 : i32
    %c0_i32_1 = arith.constant 0 : i32
    return %arg0, %c0_i32, %c0_i32_0 : i32, i32, i32
  }
}

module attributes {stable_mosaic.version = 11 : i64} {
  func.func @_linear_wres_kernel(%arg0: i32, %arg1: memref<32x32xf32, #tpu.memory_space<vmem>>, %arg2: memref<32x64xf32, #tpu.memory_space<vmem>>, %arg3: memref<32x64xf32, #tpu.memory_space<vmem>>) attributes {dimension_semantics = [#tpu.dimension_semantics<parallel>], iteration_bounds = array<i64: 1>, scalar_prefetch = 0 : i64, scratch_operands = 0 : i64, tpu.core_type = #tpu.core_type<tc>, window_params = [{transform_indices = @transform_0, window_bounds = array<i64: 32, 32>}, {pipeline_mode = #tpu.pipeline_mode<synchronous>, transform_indices = @transform_1, window_bounds = array<i64: 32, 64>}, {transform_indices = @transform_2, window_bounds = array<i64: 32, 64>}]} {
    %c0 = arith.constant 0 : index
    %c0_0 = arith.constant 0 : index
    %0 = vector.load %arg1[%c0, %c0_0] : memref<32x32xf32, #tpu.memory_space<vmem>>, vector<32x32xf32>
    %c0_1 = arith.constant 0 : index
    %c0_2 = arith.constant 0 : index
    %1 = vector.load %arg2[%c0_1, %c0_2] : memref<32x64xf32, #tpu.memory_space<vmem>>, vector<32x64xf32>
    %cst = arith.constant dense<0.000000e+00> : vector<32x64xf32>
    %2 = tpu.matmul %0, %1, %cst {dimension_numbers = #tpu.dot_dimension_numbers<[1], [0], [0], [1], [0, 0, 1, 1], [], []>} : vector<32x32xf32>, vector<32x64xf32>, vector<32x64xf32> -> vector<32x64xf32>
    %c0_3 = arith.constant 0 : index
    %c0_4 = arith.constant 0 : index
    %3 = vector.load %arg3[%c0_3, %c0_4] : memref<32x64xf32, #tpu.memory_space<vmem>>, vector<32x64xf32>
    tpu.vector_store %arg3[%c0_3, %c0_4], %2 {strides = array<i32>} : memref<32x64xf32, #tpu.memory_space<vmem>>, vector<32x64xf32>,
    return
  }
  func.func @transform_0(%arg0: i32) -> (i32, i32) {
    %c0_i32 = arith.constant 0 : i32
    %c0_i32_0 = arith.constant 0 : i32
    return %arg0, %c0_i32 : i32, i32
  }
  func.func @transform_1(%arg0: i32) -> (i32, i32) {
    %c0_i32 = arith.constant 0 : i32
    %c0_i32_0 = arith.constant 0 : i32
    %c0_i32_1 = arith.constant 0 : i32
    return %c0_i32, %c0_i32_0 : i32, i32
  }
  func.func @transform_2(%arg0: i32) -> (i32, i32) {
    %c0_i32 = arith.constant 0 : i32
    %c0_i32_0 = arith.constant 0 : i32
    return %arg0, %c0_i32 : i32, i32
  }
}

module attributes {stable_mosaic.version = 11 : i64} {
  func.func @_linear_wres_kernel(%arg0: i32, %arg1: memref<32x32xf32, #tpu.memory_space<vmem>>, %arg2: memref<32x32xf32, #tpu.memory_space<vmem>>, %arg3: memref<32x32xf32, #tpu.memory_space<vmem>>) attributes {dimension_semantics = [#tpu.dimension_semantics<parallel>], iteration_bounds = array<i64: 1>, scalar_prefetch = 0 : i64, scratch_operands = 0 : i64, tpu.core_type = #tpu.core_type<tc>, window_params = [{transform_indices = @transform_0, window_bounds = array<i64: 32, 32>}, {pipeline_mode = #tpu.pipeline_mode<synchronous>, transform_indices = @transform_1, window_bounds = array<i64: 32, 32>}, {transform_indices = @transform_2, window_bounds = array<i64: 32, 32>}]} {
    %c0 = arith.constant 0 : index
    %c0_0 = arith.constant 0 : index
    %0 = vector.load %arg1[%c0, %c0_0] : memref<32x32xf32, #tpu.memory_space<vmem>>, vector<32x32xf32>
    %c0_1 = arith.constant 0 : index
    %c0_2 = arith.constant 0 : index
    %1 = vector.load %arg2[%c0_1, %c0_2] : memref<32x32xf32, #tpu.memory_space<vmem>>, vector<32x32xf32>
    %cst = arith.constant dense<0.000000e+00> : vector<32x32xf32>
    %2 = tpu.matmul %0, %1, %cst {dimension_numbers = #tpu.dot_dimension_numbers<[1], [0], [0], [1], [0, 0, 1, 1], [], []>} : vector<32x32xf32>, vector<32x32xf32>, vector<32x32xf32> -> vector<32x32xf32>
    %c0_3 = arith.constant 0 : index
    %c0_4 = arith.constant 0 : index
    %3 = vector.load %arg3[%c0_3, %c0_4] : memref<32x32xf32, #tpu.memory_space<vmem>>, vector<32x32xf32>
    tpu.vector_store %arg3[%c0_3, %c0_4], %2 {strides = array<i32>} : memref<32x32xf32, #tpu.memory_space<vmem>>, vector<32x32xf32>,
    return
  }
  func.func @transform_0(%arg0: i32) -> (i32, i32) {
    %c0_i32 = arith.constant 0 : i32
    %c0_i32_0 = arith.constant 0 : i32
    return %arg0, %c0_i32 : i32, i32
  }
  func.func @transform_1(%arg0: i32) -> (i32, i32) {
    %c0_i32 = arith.constant 0 : i32
    %c0_i32_0 = arith.constant 0 : i32
    %c0_i32_1 = arith.constant 0 : i32
    return %c0_i32, %c0_i32_0 : i32, i32
  }
  func.func @transform_2(%arg0: i32) -> (i32, i32) {
    %c0_i32 = arith.constant 0 : i32
    %c0_i32_0 = arith.constant 0 : i32
    return %arg0, %c0_i32 : i32, i32
  }
}

module attributes {stable_mosaic.version = 11 : i64} {
  func.func @_linear_wres_bias_kernel(%arg0: i32, %arg1: memref<32x32xf32, #tpu.memory_space<vmem>>, %arg2: memref<32x32xf32, #tpu.memory_space<vmem>>, %arg3: memref<1x32xf32, #tpu.memory_space<vmem>>, %arg4: memref<32x32xf32, #tpu.memory_space<vmem>>) attributes {dimension_semantics = [#tpu.dimension_semantics<parallel>], iteration_bounds = array<i64: 1>, scalar_prefetch = 0 : i64, scratch_operands = 0 : i64, tpu.core_type = #tpu.core_type<tc>, window_params = [{transform_indices = @transform_0, window_bounds = array<i64: 32, 32>}, {pipeline_mode = #tpu.pipeline_mode<synchronous>, transform_indices = @transform_1, window_bounds = array<i64: 32, 32>}, {pipeline_mode = #tpu.pipeline_mode<synchronous>, transform_indices = @transform_2, window_bounds = array<i64: 1, 32>}, {transform_indices = @transform_3, window_bounds = array<i64: 32, 32>}]} {
    %c0 = arith.constant 0 : index
    %c0_0 = arith.constant 0 : index
    %0 = vector.load %arg1[%c0, %c0_0] : memref<32x32xf32, #tpu.memory_space<vmem>>, vector<32x32xf32>
    %c0_1 = arith.constant 0 : index
    %c0_2 = arith.constant 0 : index
    %1 = vector.load %arg2[%c0_1, %c0_2] : memref<32x32xf32, #tpu.memory_space<vmem>>, vector<32x32xf32>
    %cst = arith.constant dense<0.000000e+00> : vector<32x32xf32>
    %2 = tpu.matmul %0, %1, %cst {dimension_numbers = #tpu.dot_dimension_numbers<[1], [0], [0], [1], [0, 0, 1, 1], [], []>} : vector<32x32xf32>, vector<32x32xf32>, vector<32x32xf32> -> vector<32x32xf32>
    %c0_3 = arith.constant 0 : index
    %c0_4 = arith.constant 0 : index
    %3 = vector.load %arg3[%c0_3, %c0_4] : memref<1x32xf32, #tpu.memory_space<vmem>>, vector<1x32xf32>
    %4 = vector.broadcast %3 : vector<1x32xf32> to vector<32x32xf32>
    %5 = arith.addf %2, %4 : vector<32x32xf32>
    %c0_5 = arith.constant 0 : index
    %c0_6 = arith.constant 0 : index
    %6 = vector.load %arg4[%c0_5, %c0_6] : memref<32x32xf32, #tpu.memory_space<vmem>>, vector<32x32xf32>
    tpu.vector_store %arg4[%c0_5, %c0_6], %5 {strides = array<i32>} : memref<32x32xf32, #tpu.memory_space<vmem>>, vector<32x32xf32>,
    return
  }
  func.func @transform_0(%arg0: i32) -> (i32, i32) {
    %c0_i32 = arith.constant 0 : i32
    %c0_i32_0 = arith.constant 0 : i32
    return %arg0, %c0_i32 : i32, i32
  }
  func.func @transform_1(%arg0: i32) -> (i32, i32) {
    %c0_i32 = arith.constant 0 : i32
    %c0_i32_0 = arith.constant 0 : i32
    %c0_i32_1 = arith.constant 0 : i32
    return %c0_i32, %c0_i32_0 : i32, i32
  }
  func.func @transform_2(%arg0: i32) -> (i32, i32) {
    %c0_i32 = arith.constant 0 : i32
    %c0_i32_0 = arith.constant 0 : i32
    %c0_i32_1 = arith.constant 0 : i32
    return %c0_i32, %c0_i32_0 : i32, i32
  }
  func.func @transform_3(%arg0: i32) -> (i32, i32) {
    %c0_i32 = arith.constant 0 : i32
    %c0_i32_0 = arith.constant 0 : i32
    return %arg0, %c0_i32 : i32, i32
  }
}

</mosaic_0001>

<llo_original>
// kernel: tile.9
$region0: #{tile.9}
  #allocation0 [shape = 's32[1]{0}', space=sflag, size = 0x4, scoped, tag = 'scoped memory for tile.9']
  %s0 = inlined_call_operand.vmem [shape: s32[4,4], index: 0, kind: input, shape index: {}]
  %s1 = inlined_call_operand.vmem [shape: s32[4,4,4,4], index: 1, kind: output, shape index: {}]
  // Predicated region
  $region2: #{tile.9} parent=0 // pred_check
    _
  $region3: #{tile.9} parent=0 // pred_check_branch
    %3 = sbr.rel (0) target = $region5
  $region4: #{tile.9} parent=0 // pred_region
    _
  $region5: #{tile.9} parent=0 // pred_fallthru
    _
  %v4 = vld [vmem:[%s0] ss:$0 sm:$0xff]
  %5 = vst [vmem:[%s1] sm:$0xf] %v4
  %s6 = scalar_lea.vmem %s1, 16
  %7 = vst [vmem:[%s6] sm:$0xf] %v4
  %s8 = scalar_lea.vmem %s1, 32
  %9 = vst [vmem:[%s8] sm:$0xf] %v4
  %s10 = scalar_lea.vmem %s1, 48
  %11 = vst [vmem:[%s10] sm:$0xf] %v4
  %s12 = scalar_lea.vmem %s0, 1
  %v13 = vld [vmem:[%s12] ss:$0 sm:$0xff]
  %s14 = scalar_lea.vmem %s1, 4
  %15 = vst [vmem:[%s14] sm:$0xf] %v13
  %s16 = scalar_lea.vmem %s1, 20
  %17 = vst [vmem:[%s16] sm:$0xf] %v13
  %s18 = scalar_lea.vmem %s1, 36
  %19 = vst [vmem:[%s18] sm:$0xf] %v13
  %s20 = scalar_lea.vmem %s1, 52
  %21 = vst [vmem:[%s20] sm:$0xf] %v13
  %s22 = scalar_lea.vmem %s0, 2
  %v23 = vld [vmem:[%s22] ss:$0 sm:$0xff]
  %s24 = scalar_lea.vmem %s1, 8
  %25 = vst [vmem:[%s24] sm:$0xf] %v23
  %s26 = scalar_lea.vmem %s1, 24
  %27 = vst [vmem:[%s26] sm:$0xf] %v23
  %s28 = scalar_lea.vmem %s1, 40
  %29 = vst [vmem:[%s28] sm:$0xf] %v23
  %s30 = scalar_lea.vmem %s1, 56
  %31 = vst [vmem:[%s30] sm:$0xf] %v23
  %s32 = scalar_lea.vmem %s0, 3
  %v33 = vld [vmem:[%s32] ss:$0 sm:$0xff]
  %s34 = scalar_lea.vmem %s1, 12
  %35 = vst [vmem:[%s34] sm:$0xf] %v33
  %s36 = scalar_lea.vmem %s1, 28
  %37 = vst [vmem:[%s36] sm:$0xf] %v33
  %s38 = scalar_lea.vmem %s1, 44
  %39 = vst [vmem:[%s38] sm:$0xf] %v33
  %s40 = scalar_lea.vmem %s1, 60
  %41 = vst [vmem:[%s40] sm:$0xf] %v33

// kernel: tile.11
$region0: #{tile.11}
  %s0 = inlined_call_operand.vmem [shape: s32[4,4,4,4], index: 0, kind: input, shape index: {}]
  %s1 = inlined_call_operand.vmem [shape: s32[16,16,1], index: 1, kind: output, shape index: {}]
  $region1: #{tile.11} parent=0
    #allocation0 [shape = 'u8[65536]{0}', space=vmem, size = 0x10000, scoped, tag = 'scoped mem for input reshape']
    %s3 = ssub.s32 16, 1
    %s4 = scalar_lea.vmem %s0, 60
    %v5 = vld [vmem:[%s4] sm:%s3]
    %s6 = scalar_lea.vmem [#allocation0], 120
    %7 = vst [vmem:[%s6] sm:%s3] %v5
    %s8 = scalar_lea.vmem %s0, 56
    %v9 = vld [vmem:[%s8] sm:%s3]
    %s10 = scalar_lea.vmem [#allocation0], 112
    %11 = vst [vmem:[%s10] sm:%s3] %v9
    %s12 = scalar_lea.vmem %s0, 52
    %v13 = vld [vmem:[%s12] sm:%s3]
    %s14 = scalar_lea.vmem [#allocation0], 104
    %15 = vst [vmem:[%s14] sm:%s3] %v13
    %s16 = scalar_lea.vmem %s0, 48
    %v17 = vld [vmem:[%s16] sm:%s3]
    %s18 = scalar_lea.vmem [#allocation0], 96
    %19 = vst [vmem:[%s18] sm:%s3] %v17
    %s20 = scalar_lea.vmem %s0, 44
    %v21 = vld [vmem:[%s20] sm:%s3]
    %s22 = scalar_lea.vmem [#allocation0], 88
    %23 = vst [vmem:[%s22] sm:%s3] %v21
    %s24 = scalar_lea.vmem %s0, 40
    %v25 = vld [vmem:[%s24] sm:%s3]
    %s26 = scalar_lea.vmem [#allocation0], 80
    %27 = vst [vmem:[%s26] sm:%s3] %v25
    %s28 = scalar_lea.vmem %s0, 36
    %v29 = vld [vmem:[%s28] sm:%s3]
    %s30 = scalar_lea.vmem [#allocation0], 72
    %31 = vst [vmem:[%s30] sm:%s3] %v29
    %s32 = scalar_lea.vmem %s0, 32
    %v33 = vld [vmem:[%s32] sm:%s3]
    %s34 = scalar_lea.vmem [#allocation0], 64
    %35 = vst [vmem:[%s34] sm:%s3] %v33
    %s36 = scalar_lea.vmem %s0, 28
    %v37 = vld [vmem:[%s36] sm:%s3]
    %s38 = scalar_lea.vmem [#allocation0], 56
    %39 = vst [vmem:[%s38] sm:%s3] %v37
    %s40 = scalar_lea.vmem %s0, 24
    %v41 = vld [vmem:[%s40] sm:%s3]
    %s42 = scalar_lea.vmem [#allocation0], 48
    %43 = vst [vmem:[%s42] sm:%s3] %v41
    %s44 = scalar_lea.vmem %s0, 20
    %v45 = vld [vmem:[%s44] sm:%s3]
    %s46 = scalar_lea.vmem [#allocation0], 40
    %47 = vst [vmem:[%s46] sm:%s3] %v45
    %s48 = scalar_lea.vmem %s0, 16
    %v49 = vld [vmem:[%s48] sm:%s3]
    %s50 = scalar_lea.vmem [#allocation0], 32
    %51 = vst [vmem:[%s50] sm:%s3] %v49
    %s52 = scalar_lea.vmem %s0, 12
    %v53 = vld [vmem:[%s52] sm:%s3]
    %s54 = scalar_lea.vmem [#allocation0], 24
    %55 = vst [vmem:[%s54] sm:%s3] %v53
    %s56 = scalar_lea.vmem %s0, 8
    %v57 = vld [vmem:[%s56] sm:%s3]
    %s58 = scalar_lea.vmem [#allocation0], 16
    %59 = vst [vmem:[%s58] sm:%s3] %v57
    %s60 = scalar_lea.vmem %s0, 4
    %v61 = vld [vmem:[%s60] sm:%s3]
    %s62 = scalar_lea.vmem [#allocation0], 8
    %63 = vst [vmem:[%s62] sm:%s3] %v61
    %v64 = vld [vmem:[%s0] sm:%s3]
    %65 = vst [vmem:[#allocation0] sm:%s3] %v64
    %v66 = vld [vmem:[#allocation0] ss:$8 sm:$0xf]
    %v67 = vld [vmem:[#allocation0] ss:$8 sm:$0xf0]
    %vm68 = vcmask 1047556
    %v69 = vsel %vm68, %v67, %v66
    %vm70 = vcmask 31744
    %71 = vst.msk [vmem:[%s1] sm:$0xff] %vm70, %v69
    %s72 = scalar_lea.vmem [#allocation0], 64
    %v73 = vld [vmem:[%s72] ss:$8 sm:$0xf]
    %s74 = scalar_lea.vmem [#allocation0], 64
    %v75 = vld [vmem:[%s74] ss:$8 sm:$0xf0]
    %vm76 = vcmask 1047556
    %v77 = vsel %vm76, %v75, %v73
    %vm78 = vcmask 31744
    %s79 = scalar_lea.vmem %s1, 8
    %80 = vst.msk [vmem:[%s79] sm:$0xff] %vm78, %v77
    %s81 = scalar_lea.vmem [#allocation0], 3
    %v82 = vld [vmem:[%s81] ss:$8 sm:$0xf]
    %s83 = scalar_lea.vmem [#allocation0], 3
    %v84 = vld [vmem:[%s83] ss:$8 sm:$0xf0]
    %vm85 = vcmask 1047556
    %v86 = vsel %vm85, %v84, %v82
    %87 = vrot.lane.b32.xlu0 %v86, 12
    %v88 = vpop.permute.xlu0 %87
    %vm89 = vcmask 130144
    %90 = vst.msk [vmem:[%s1] sm:$0xff] %vm89, %v88
    %s91 = scalar_lea.vmem [#allocation0], 67
    %v92 = vld [vmem:[%s91] ss:$8 sm:$0xf]
    %s93 = scalar_lea.vmem [#allocation0], 67
    %v94 = vld [vmem:[%s93] ss:$8 sm:$0xf0]
    %vm95 = vcmask 1047556
    %v96 = vsel %vm95, %v94, %v92
    %97 = vrot.lane.b32.xlu0 %v96, 12
    %v98 = vpop.permute.xlu0 %97
    %vm99 = vcmask 130144
    %s100 = scalar_lea.vmem %s1, 8
    %101 = vst.msk [vmem:[%s100] sm:$0xff] %vm99, %v98
    %s102 = scalar_lea.vmem [#allocation0], 2
    %v103 = vld [vmem:[%s102] ss:$8 sm:$0xf]
    %s104 = scalar_lea.vmem [#allocation0], 2
    %v105 = vld [vmem:[%s104] ss:$8 sm:$0xf0]
    %vm106 = vcmask 1047556
    %v107 = vsel %vm106, %v105, %v103
    %108 = vrot.lane.b32.xlu0 %v107, 8
    %v109 = vpop.permute.xlu0 %108
    %vm110 = vcmask 97344
    %111 = vst.msk [vmem:[%s1] sm:$0xff] %vm110, %v109
    %s112 = scalar_lea.vmem [#allocation0], 66
    %v113 = vld [vmem:[%s112] ss:$8 sm:$0xf]
    %s114 = scalar_lea.vmem [#allocation0], 66
    %v115 = vld [vmem:[%s114] ss:$8 sm:$0xf0]
    %vm116 = vcmask 1047556
    %v117 = vsel %vm116, %v115, %v113
    %118 = vrot.lane.b32.xlu0 %v117, 8
    %v119 = vpop.permute.xlu0 %118
    %vm120 = vcmask 97344
    %s121 = scalar_lea.vmem %s1, 8
    %122 = vst.msk [vmem:[%s121] sm:$0xff] %vm120, %v119
    %s123 = scalar_lea.vmem [#allocation0], 1
    %v124 = vld [vmem:[%s123] ss:$8 sm:$0xf]
    %s125 = scalar_lea.vmem [#allocation0], 1
    %v126 = vld [vmem:[%s125] ss:$8 sm:$0xf0]
    %vm127 = vcmask 1047556
    %v128 = vsel %vm127, %v126, %v124
    %129 = vrot.lane.b32.xlu0 %v128, 4
    %v130 = vpop.permute.xlu0 %129
    %vm131 = vcmask 64544
    %132 = vst.msk [vmem:[%s1] sm:$0xff] %vm131, %v130
    %s133 = scalar_lea.vmem [#allocation0], 65
    %v134 = vld [vmem:[%s133] ss:$8 sm:$0xf]
    %s135 = scalar_lea.vmem [#allocation0], 65
    %v136 = vld [vmem:[%s135] ss:$8 sm:$0xf0]
    %vm137 = vcmask 1047556
    %v138 = vsel %vm137, %v136, %v134
    %139 = vrot.lane.b32.xlu0 %v138, 4
    %v140 = vpop.permute.xlu0 %139
    %vm141 = vcmask 64544
    %s142 = scalar_lea.vmem %s1, 8
    %143 = vst.msk [vmem:[%s142] sm:$0xff] %vm141, %v140

// kernel: gpsa_forward.5
$region0: #{gpsa_forward.5}
  #allocation0 [shape = 'u32[]', space=smem, size = 0x4, offset = 0x4, fixed_abs, tag = 'smem constant byte address 0x4 - core index']
  #allocation1 [shape = 'u32[72,128]{1,0:T(1,128)}', space=vmem, size = 0x9000, scoped, tag = 'internal scratch']
  %s0 = inlined_call_operand.vmem [shape: f32[32,32], index: 0, kind: input, shape index: {}]
  %s1 = inlined_call_operand.vmem [shape: f32[32,32], index: 1, kind: input, shape index: {}]
  %s2 = inlined_call_operand.vmem [shape: f32[32,32], index: 2, kind: output, shape index: {}]
  %s3 = sld [smem:[#allocation0]]
  $region18: #{gpsa_forward.5} parent=0
    _
  %s5 = ssub.s32 1, %s3
  %s6 = scalar_select 0, %s5, %s3
  // Predicated region
  $region2: #{gpsa_forward.5} parent=0 // pred_check
    _
  $region3: #{gpsa_forward.5} parent=0 // pred_check_branch
    %8 = sbr.rel (0) target = $region5
  $region4: #{gpsa_forward.5} parent=0 // pred_region
    _
  $region5: #{gpsa_forward.5} parent=0 // pred_fallthru
    _
  // Predicated region
  $region6: #{gpsa_forward.5} parent=0 // pred_check
    _
  $region7: #{gpsa_forward.5} parent=0 // pred_check_branch
    %10 = sbr.rel (0) target = $region9
  $region8: #{gpsa_forward.5} parent=0 // pred_region
    _
  $region9: #{gpsa_forward.5} parent=0 // pred_fallthru
    _
  %v11 = vld [vmem:[%s0] sm:$0xff]
  %v12 = vld [vmem:[%s0 + $0x8] sm:$0xff]
  %v13 = vld [vmem:[%s0 + $0x10] sm:$0xff]
  %v14 = vld [vmem:[%s0 + $0x18] sm:$0xff]
  %v15 = vld [vmem:[%s1] sm:$0xff]
  %v16 = vld [vmem:[%s1 + $0x8] sm:$0xff]
  %v17 = vld [vmem:[%s1 + $0x10] sm:$0xff]
  %v18 = vld [vmem:[%s1 + $0x18] sm:$0xff]
  %vm19 = vcmask 261120
  %v21 = vsel %vm19, %v11, 0
  %v24 = vsel %vm19, %v12, 0
  %v27 = vsel %vm19, %v13, 0
  %v30 = vsel %vm19, %v14, 0
  %32 = vmatpush.msra.mxu0 0.0
  %33 = vmatpush.msra.mxu0 0.0
  %34 = vmatpush.msra.mxu0 0.0
  %35 = vmatpush.msra.mxu0 0.0
  %36 = vmatpush.msra.mxu0 0.0
  %37 = vmatpush.msra.mxu0 0.0
  %38 = vmatpush.msra.mxu0 0.0
  %39 = vmatpush.msra.mxu0 0.0
  %40 = vmatpush.msra.mxu0 0.0
  %41 = vmatpush.msra.mxu0 0.0
  %42 = vmatpush.msra.mxu0 0.0
  %43 = vmatpush.msra.mxu0 0.0
  %44 = vmatpush.msra.mxu0 %v18
  %45 = vmatpush.msra.mxu0 %v17
  %46 = vmatpush.msra.mxu0 %v16
  %47 = vmatpush.msra.mxu0 %v15
  %48 = vmatmul.f32.gmra.mxu0 %v21
  %v49 = vpop.f32.mrf.mxu0
  %v50 = vadd.f32 0.0, %v49
  %51 = vmatmul.f32.gmra.mxu0 %v24
  %v52 = vpop.f32.mrf.mxu0
  %v53 = vadd.f32 0.0, %v52
  %54 = vmatmul.f32.gmra.mxu0 %v27
  %v55 = vpop.f32.mrf.mxu0
  %v56 = vadd.f32 0.0, %v55
  %57 = vmatmul.f32.gmra.mxu0 %v30
  %v58 = vpop.f32.mrf.mxu0
  %v59 = vadd.f32 0.0, %v58
  %60 = vdwg.mxu0
  %61 = vst.msk [vmem:[%s2] sm:$0xff] %vm19, %v50
  %62 = vst.msk [vmem:[%s2 + $0x8] sm:$0xff] %vm19, %v53
  %63 = vst.msk [vmem:[%s2 + $0x10] sm:$0xff] %vm19, %v56
  %64 = vst.msk [vmem:[%s2 + $0x18] sm:$0xff] %vm19, %v59
  // Predicated region
  $region10: #{gpsa_forward.5} parent=0 // pred_check
    _
  $region11: #{gpsa_forward.5} parent=0 // pred_check_branch
    %66 = sbr.rel (0) target = $region13
  $region12: #{gpsa_forward.5} parent=0 // pred_region
    _
  $region13: #{gpsa_forward.5} parent=0 // pred_fallthru
    _
  // Predicated region
  $region14: #{gpsa_forward.5} parent=0 // pred_check
    _
  $region15: #{gpsa_forward.5} parent=0 // pred_check_branch
    %68 = sbr.rel (0) target = $region17
  $region16: #{gpsa_forward.5} parent=0 // pred_region
    _
  $region17: #{gpsa_forward.5} parent=0 // pred_fallthru
    _

// kernel: gpsa_forward.4
$region0: #{gpsa_forward.4}
  #allocation0 [shape = 'u32[]', space=smem, size = 0x4, offset = 0x4, fixed_abs, tag = 'smem constant byte address 0x4 - core index']
  #allocation1 [shape = 'u32[72,128]{1,0:T(1,128)}', space=vmem, size = 0x9000, scoped, tag = 'internal scratch']
  %s0 = inlined_call_operand.vmem [shape: f32[32,32], index: 0, kind: input, shape index: {}]
  %s1 = inlined_call_operand.vmem [shape: f32[32,64], index: 1, kind: input, shape index: {}]
  %s2 = inlined_call_operand.vmem [shape: f32[32,64], index: 2, kind: output, shape index: {}]
  %s3 = sld [smem:[#allocation0]]
  $region18: #{gpsa_forward.4} parent=0
    _
  %s5 = ssub.s32 1, %s3
  %s6 = scalar_select 0, %s5, %s3
  // Predicated region
  $region2: #{gpsa_forward.4} parent=0 // pred_check
    _
  $region3: #{gpsa_forward.4} parent=0 // pred_check_branch
    %8 = sbr.rel (0) target = $region5
  $region4: #{gpsa_forward.4} parent=0 // pred_region
    _
  $region5: #{gpsa_forward.4} parent=0 // pred_fallthru
    _
  // Predicated region
  $region6: #{gpsa_forward.4} parent=0 // pred_check
    _
  $region7: #{gpsa_forward.4} parent=0 // pred_check_branch
    %10 = sbr.rel (0) target = $region9
  $region8: #{gpsa_forward.4} parent=0 // pred_region
    _
  $region9: #{gpsa_forward.4} parent=0 // pred_fallthru
    _
  %v11 = vld [vmem:[%s0] sm:$0xff]
  %v12 = vld [vmem:[%s0 + $0x8] sm:$0xff]
  %v13 = vld [vmem:[%s0 + $0x10] sm:$0xff]
  %v14 = vld [vmem:[%s0 + $0x18] sm:$0xff]
  %v15 = vld [vmem:[%s1] sm:$0xff]
  %v16 = vld [vmem:[%s1 + $0x8] sm:$0xff]
  %v17 = vld [vmem:[%s1 + $0x10] sm:$0xff]
  %v18 = vld [vmem:[%s1 + $0x18] sm:$0xff]
  %vm19 = vcmask 261120
  %v21 = vsel %vm19, %v11, 0
  %v24 = vsel %vm19, %v12, 0
  %v27 = vsel %vm19, %v13, 0
  %v30 = vsel %vm19, %v14, 0
  %32 = vmatpush.msra.mxu0 0.0
  %33 = vmatpush.msra.mxu0 0.0
  %34 = vmatpush.msra.mxu0 0.0
  %35 = vmatpush.msra.mxu0 0.0
  %36 = vmatpush.msra.mxu0 0.0
  %37 = vmatpush.msra.mxu0 0.0
  %38 = vmatpush.msra.mxu0 0.0
  %39 = vmatpush.msra.mxu0 0.0
  %40 = vmatpush.msra.mxu0 0.0
  %41 = vmatpush.msra.mxu0 0.0
  %42 = vmatpush.msra.mxu0 0.0
  %43 = vmatpush.msra.mxu0 0.0
  %44 = vmatpush.msra.mxu0 %v18
  %45 = vmatpush.msra.mxu0 %v17
  %46 = vmatpush.msra.mxu0 %v16
  %47 = vmatpush.msra.mxu0 %v15
  %48 = vmatmul.f32.gmra.mxu0 %v21
  %v49 = vpop.f32.mrf.mxu0
  %v50 = vadd.f32 0.0, %v49
  %51 = vmatmul.f32.gmra.mxu0 %v24
  %v52 = vpop.f32.mrf.mxu0
  %v53 = vadd.f32 0.0, %v52
  %54 = vmatmul.f32.gmra.mxu0 %v27
  %v55 = vpop.f32.mrf.mxu0
  %v56 = vadd.f32 0.0, %v55
  %57 = vmatmul.f32.gmra.mxu0 %v30
  %v58 = vpop.f32.mrf.mxu0
  %v59 = vadd.f32 0.0, %v58
  %60 = vdwg.mxu0
  %vm61 = vcmask 523264
  %62 = vst.msk [vmem:[%s2] sm:$0xff] %vm61, %v50
  %63 = vst.msk [vmem:[%s2 + $0x8] sm:$0xff] %vm61, %v53
  %64 = vst.msk [vmem:[%s2 + $0x10] sm:$0xff] %vm61, %v56
  %65 = vst.msk [vmem:[%s2 + $0x18] sm:$0xff] %vm61, %v59
  // Predicated region
  $region10: #{gpsa_forward.4} parent=0 // pred_check
    _
  $region11: #{gpsa_forward.4} parent=0 // pred_check_branch
    %67 = sbr.rel (0) target = $region13
  $region12: #{gpsa_forward.4} parent=0 // pred_region
    _
  $region13: #{gpsa_forward.4} parent=0 // pred_fallthru
    _
  // Predicated region
  $region14: #{gpsa_forward.4} parent=0 // pred_check
    _
  $region15: #{gpsa_forward.4} parent=0 // pred_check_branch
    %69 = sbr.rel (0) target = $region17
  $region16: #{gpsa_forward.4} parent=0 // pred_region
    _
  $region17: #{gpsa_forward.4} parent=0 // pred_fallthru
    _

// kernel: gpsa_forward.7
$region0: #{gpsa_forward.7}
  #allocation0 [shape = 'u32[]', space=smem, size = 0x4, offset = 0x4, fixed_abs, tag = 'smem constant byte address 0x4 - core index']
  #allocation1 [shape = 'u32[72,128]{1,0:T(1,128)}', space=vmem, size = 0x9000, scoped, tag = 'internal scratch']
  %s0 = inlined_call_operand.vmem [shape: f32[32,32], index: 0, kind: input, shape index: {}]
  %s1 = inlined_call_operand.vmem [shape: f32[32,32], index: 1, kind: input, shape index: {}]
  %s2 = inlined_call_operand.vmem [shape: f32[1,32], index: 2, kind: input, shape index: {}]
  %s3 = inlined_call_operand.hbm [shape: f32[32,32], index: 3, kind: output, shape index: {}]
  %s4 = sld [smem:[#allocation0]]
  $region22: #{gpsa_forward.7} parent=0
    _
  %s6 = ssub.s32 1, %s4
  %s7 = scalar_select 0, %s6, %s4
  $region1: #{gpsa_forward.7} parent=0
    #allocation2 [shape = 'u8[16384]{0}', space=vmem, size = 0x4000, scoped, tag = 'output window, operand 0, single buffered']
    #allocation3 [shape = 's32[1]{0}', space=sflag, size = 0x4, scoped, tag = 'scoped memory for gpsa_forward.7']
    %8 = vsyncpa [#allocation3], 0
    // Predicated region
    $region2: #{gpsa_forward.7} parent=1 // pred_check
      _
    $region3: #{gpsa_forward.7} parent=1 // pred_check_branch
      %10 = sbr.rel (0) target = $region5
    $region4: #{gpsa_forward.7} parent=1 // pred_region
      _
    $region5: #{gpsa_forward.7} parent=1 // pred_fallthru
      _
    // Predicated region
    $region6: #{gpsa_forward.7} parent=1 // pred_check
      _
    $region7: #{gpsa_forward.7} parent=1 // pred_check_branch
      %12 = sbr.rel (0) target = $region9
    $region8: #{gpsa_forward.7} parent=1 // pred_region
      _
    $region9: #{gpsa_forward.7} parent=1 // pred_fallthru
      _
    // Predicated region
    $region10: #{gpsa_forward.7} parent=1 // pred_check
      _
    $region11: #{gpsa_forward.7} parent=1 // pred_check_branch
      %14 = sbr.rel (0) target = $region13
    $region12: #{gpsa_forward.7} parent=1 // pred_region
      _
    $region13: #{gpsa_forward.7} parent=1 // pred_fallthru
      _
    %v15 = vld [vmem:[%s0] sm:$0xff]
    %v16 = vld [vmem:[%s0 + $0x8] sm:$0xff]
    %v17 = vld [vmem:[%s0 + $0x10] sm:$0xff]
    %v18 = vld [vmem:[%s0 + $0x18] sm:$0xff]
    %v19 = vld [vmem:[%s1] sm:$0xff]
    %v20 = vld [vmem:[%s1 + $0x8] sm:$0xff]
    %v21 = vld [vmem:[%s1 + $0x10] sm:$0xff]
    %v22 = vld [vmem:[%s1 + $0x18] sm:$0xff]
    %v23 = vld [vmem:[%s2] sm:$0x1]
    %v25 = vperm.slane %v23, 0
    %vm27 = vcmask 261120
    %v29 = vsel %vm27, %v15, 0
    %v32 = vsel %vm27, %v16, 0
    %v35 = vsel %vm27, %v17, 0
    %v38 = vsel %vm27, %v18, 0
    %40 = vmatpush.msra.mxu0 0.0
    %41 = vmatpush.msra.mxu0 0.0
    %42 = vmatpush.msra.mxu0 0.0
    %43 = vmatpush.msra.mxu0 0.0
    %44 = vmatpush.msra.mxu0 0.0
    %45 = vmatpush.msra.mxu0 0.0
    %46 = vmatpush.msra.mxu0 0.0
    %47 = vmatpush.msra.mxu0 0.0
    %48 = vmatpush.msra.mxu0 0.0
    %49 = vmatpush.msra.mxu0 0.0
    %50 = vmatpush.msra.mxu0 0.0
    %51 = vmatpush.msra.mxu0 0.0
    %52 = vmatpush.msra.mxu0 %v22
    %53 = vmatpush.msra.mxu0 %v21
    %54 = vmatpush.msra.mxu0 %v20
    %55 = vmatpush.msra.mxu0 %v19
    %56 = vmatmul.f32.gmra.mxu0 %v29
    %v57 = vpop.f32.mrf.mxu0
    %v58 = vadd.f32 %v25, %v57
    %59 = vmatmul.f32.gmra.mxu0 %v32
    %v60 = vpop.f32.mrf.mxu0
    %v61 = vadd.f32 %v25, %v60
    %62 = vmatmul.f32.gmra.mxu0 %v35
    %v63 = vpop.f32.mrf.mxu0
    %v64 = vadd.f32 %v25, %v63
    %65 = vmatmul.f32.gmra.mxu0 %v38
    %v66 = vpop.f32.mrf.mxu0
    %v67 = vadd.f32 %v25, %v66
    %68 = vdwg.mxu0
    %69 = vst.msk [vmem:[#allocation2] sm:$0xff] %vm27, %v58
    %70 = vst.msk [vmem:[#allocation2 + $0x8] sm:$0xff] %vm27, %v61
    %71 = vst.msk [vmem:[#allocation2 + $0x10] sm:$0xff] %vm27, %v64
    %72 = vst.msk [vmem:[#allocation2 + $0x18] sm:$0xff] %vm27, %v67
    // Predicated region
    $region14: #{gpsa_forward.7} parent=1 // pred_check
      _
    $region15: #{gpsa_forward.7} parent=1 // pred_check_branch
      %74 = sbr.rel (0) target = $region17
    $region16: #{gpsa_forward.7} parent=1 // pred_region
      %76 = vsyncadd [#allocation3], 0
      %s77 = sshll.u32 [#allocation2], 4
      %s78 = int_to_ptr.vmem [resolvable:$true] %s77
      %s79 = sshll.u32 %s3, 4
      %s80 = int_to_ptr.hbm [resolvable:$true] %s79
      %85 = dma.vmem_to_hbm [thread:$0]  %s78, 512, %s80, [#allocation3], 128, 128, 8
    $region17: #{gpsa_forward.7} parent=1 // pred_fallthru
      _
    // Predicated region
    $region18: #{gpsa_forward.7} parent=1 // pred_check
      _
    $region19: #{gpsa_forward.7} parent=1 // pred_check_branch
      %87 = sbr.rel (0) target = $region21
    $region20: #{gpsa_forward.7} parent=1 // pred_region
      %89 = dma.done [#allocation3], 512
    $region21: #{gpsa_forward.7} parent=1 // pred_fallthru
      _
    %90 = vsyncpa [#allocation3], 1

// kernel: gpsa_forward.6
$region0: #{gpsa_forward.6}
  #allocation0 [shape = 'u32[]', space=smem, size = 0x4, offset = 0x4, fixed_abs, tag = 'smem constant byte address 0x4 - core index']
  #allocation1 [shape = 'u32[72,128]{1,0:T(1,128)}', space=vmem, size = 0x9000, scoped, tag = 'internal scratch']
  #allocation2 [shape = 'f32[16,32]{1,0:T(8,128)}', space=vmem, size = 0x2000, scoped, tag = 'scratch operand']
  %s0 = inlined_call_operand.vmem [shape: f32[4], index: 0, kind: input, shape index: {}]
  %s1 = inlined_call_operand.vmem [shape: f32[2,16,64], index: 1, kind: input, shape index: {}]
  %s2 = inlined_call_operand.vmem [shape: f32[2,16,32], index: 2, kind: input, shape index: {}]
  %s3 = inlined_call_operand.vmem [shape: f32[4,16,16], index: 3, kind: input, shape index: {}]
  %s4 = inlined_call_operand.vmem [shape: f32[2,16,32], index: 4, kind: output, shape index: {}]
  %s5 = sld [smem:[#allocation0]]
  $region53: #{gpsa_forward.6} parent=0
    _
  %s7 = ssub.s32 1, %s5
  %s8 = scalar_select 0, %s7, %s5
  $region1: #{gpsa_forward.6} parent=0
    #allocation3 [shape = 'u8[512]{0}', space=smem, size = 0x200, scoped, tag = 'input window, operand 0, single buffered']
    #allocation4 [shape = 's32[2]{0}', space=sflag, size = 0x8, scoped, tag = 'scoped memory for gpsa_forward.6']
    %9 = vsyncpa [#allocation4], 0
    loop: start=0, step=1, limit=4
    $region2: #{gpsa_forward.6} parent=1 // loop_pre_header
      _
    $region3: #{gpsa_forward.6} parent=1 // loop_header
      %s11 = sphi 0, %s15
      %p12 = scmp.ge.s32.totalorder %s11, 4
      %s19 = sphi 0, %s19
      %s21 = sphi 0, %s19
      %s22 = sphi 0, %s21
      %s36 = sphi 0, %s22
      %s42 = sphi 0, %s44
      %s45 = sphi 0, %s42
      %s46 = sphi 0, %s45
      %s62 = sphi 0, %s46
      %s68 = sphi 0, %s70
      %s71 = sphi 0, %s68
      %s72 = sphi 0, %s71
      %s88 = sphi 0, %s72
      %s92 = sphi 0, %s92
      %s94 = sphi 0, %s92
      %s95 = sphi 0, %s94
      %s109 = sphi 0, %s95
      %s115 = sphi 0, %s117
      %s118 = sphi 0, %s115
      %s119 = sphi 0, %s118
      %s135 = sphi 0, %s119
    $region4: #{gpsa_forward.6} parent=1 // loop_header_branch
      %14 = sbr.rel (%p12) target = $region8
    $region5: #{gpsa_forward.6} parent=1 // loop_body
      %s16 = ssub.s32 %s11, 1
      %s17 = ssub.s32 %s11, 2
      %s18 = sadd.s32 %s11, 1
      %s20 = sadd.s32 %s19, 1
      %p23 = scmp.eq.s32.totalorder %s11, 1
      %p24 = scmp.ne.s32.totalorder %s19, %s21
      %p25 = scmp.eq.s32.totalorder %s11, 0
      %p26 = por %p24, %p25
      %p27 = scmp.ne.s32.totalorder %s19, %s21
      %p28 = scmp.eq.s32.totalorder %s16, 1
      %p29 = por %p27, %p28
      %p30 = scmp.ne.s32.totalorder %s21, %s22
      %p31 = scmp.eq.s32.totalorder %s16, 0
      %p32 = por %p30, %p31
      %p33 = scmp.ne.s32.totalorder %s21, %s22
      %p34 = scmp.eq.s32.totalorder %s17, 1
      %p35 = por %p33, %p34
      %p37 = scmp.ne.s32.totalorder %s22, %s36
      %p38 = scmp.eq.s32.totalorder %s17, 0
      %p39 = por %p37, %p38
      %s40 = ssub.s32 %s11, %s18
      %p41 = scmp.eq.s32.totalorder %s40, 0
      %s43 = sadd.s32 %s42, 1
      %s44 = scalar_select %p41, %s42, %s43
      %p47 = pneg %p41
      %p48 = scmp.eq.s32.totalorder %s11, 1
      %p49 = por %p47, %p48
      %p50 = scmp.ne.s32.totalorder %s42, %s45
      %p51 = scmp.eq.s32.totalorder %s11, 0
      %p52 = por %p50, %p51
      %p53 = scmp.ne.s32.totalorder %s42, %s45
      %p54 = scmp.eq.s32.totalorder %s16, 1
      %p55 = por %p53, %p54
      %p56 = scmp.ne.s32.totalorder %s45, %s46
      %p57 = scmp.eq.s32.totalorder %s16, 0
      %p58 = por %p56, %p57
      %p59 = scmp.ne.s32.totalorder %s45, %s46
      %p60 = scmp.eq.s32.totalorder %s17, 1
      %p61 = por %p59, %p60
      %p63 = scmp.ne.s32.totalorder %s46, %s62
      %p64 = scmp.eq.s32.totalorder %s17, 0
      %p65 = por %p63, %p64
      %s66 = ssub.s32 %s11, %s18
      %p67 = scmp.eq.s32.totalorder %s66, 0
      %s69 = sadd.s32 %s68, 1
      %s70 = scalar_select %p67, %s68, %s69
      %p73 = pneg %p67
      %p74 = scmp.eq.s32.totalorder %s11, 1
      %p75 = por %p73, %p74
      %p76 = scmp.ne.s32.totalorder %s68, %s71
      %p77 = scmp.eq.s32.totalorder %s11, 0
      %p78 = por %p76, %p77
      %p79 = scmp.ne.s32.totalorder %s68, %s71
      %p80 = scmp.eq.s32.totalorder %s16, 1
      %p81 = por %p79, %p80
      %p82 = scmp.ne.s32.totalorder %s71, %s72
      %p83 = scmp.eq.s32.totalorder %s16, 0
      %p84 = por %p82, %p83
      %p85 = scmp.ne.s32.totalorder %s71, %s72
      %p86 = scmp.eq.s32.totalorder %s17, 1
      %p87 = por %p85, %p86
      %p89 = scmp.ne.s32.totalorder %s72, %s88
      %p90 = scmp.eq.s32.totalorder %s17, 0
      %p91 = por %p89, %p90
      %s93 = sadd.s32 %s92, 1
      %p96 = scmp.eq.s32.totalorder %s11, 1
      %p97 = scmp.ne.s32.totalorder %s92, %s94
      %p98 = scmp.eq.s32.totalorder %s11, 0
      %p99 = por %p97, %p98
      %p100 = scmp.ne.s32.totalorder %s92, %s94
      %p101 = scmp.eq.s32.totalorder %s16, 1
      %p102 = por %p100, %p101
      %p103 = scmp.ne.s32.totalorder %s94, %s95
      %p104 = scmp.eq.s32.totalorder %s16, 0
      %p105 = por %p103, %p104
      %p106 = scmp.ne.s32.totalorder %s94, %s95
      %p107 = scmp.eq.s32.totalorder %s17, 1
      %p108 = por %p106, %p107
      %p110 = scmp.ne.s32.totalorder %s95, %s109
      %p111 = scmp.eq.s32.totalorder %s17, 0
      %p112 = por %p110, %p111
      %s113 = ssub.s32 %s11, %s18
      %p114 = scmp.eq.s32.totalorder %s113, 0
      %s116 = sadd.s32 %s115, 1
      %s117 = scalar_select %p114, %s115, %s116
      %p120 = pneg %p114
      %p121 = scmp.eq.s32.totalorder %s11, 1
      %p122 = por %p120, %p121
      %p123 = scmp.ne.s32.totalorder %s115, %s118
      %p124 = scmp.eq.s32.totalorder %s11, 0
      %p125 = por %p123, %p124
      %p126 = scmp.ne.s32.totalorder %s115, %s118
      %p127 = scmp.eq.s32.totalorder %s16, 1
      %p128 = por %p126, %p127
      %p129 = scmp.ne.s32.totalorder %s118, %s119
      %p130 = scmp.eq.s32.totalorder %s16, 0
      %p131 = por %p129, %p130
      %p132 = scmp.ne.s32.totalorder %s118, %s119
      %p133 = scmp.eq.s32.totalorder %s17, 1
      %p134 = por %p132, %p133
      %p136 = scmp.ne.s32.totalorder %s119, %s135
      %p137 = scmp.eq.s32.totalorder %s17, 0
      %p138 = por %p136, %p137
      %p139 = scmp.le.s32.totalorder 1, %s11
      %p140 = scmp.lt.s32.totalorder %s11, 3
      %p141 = pnand %p139, %p140
      %p142 = pneg %p141
      // Predicated region
      $region9: #{gpsa_forward.6} parent=5 // pred_check
        _
      $region10: #{gpsa_forward.6} parent=5 // pred_check_branch
        %144 = sbr.rel (%p141) target = $region12
      $region11: #{gpsa_forward.6} parent=5 // pred_region
        %s145 = ssub.s32 %s11, 1
        // Predicated region
        $region13: #{gpsa_forward.6} parent=11 // pred_check
          %p146 = pneg %p32
        $region14: #{gpsa_forward.6} parent=11 // pred_check_branch
          %148 = sbr.rel (%p146) target = $region16
        $region15: #{gpsa_forward.6} parent=11 // pred_region
          %150 = vsyncadd [#allocation4], 0
          %s152 = sshll.u32 %s0, 4
          %s153 = int_to_ptr.vmem [resolvable:$true] %s152
          %155 = dma.vmem_to_smem %s153, 16, [#allocation3], [#allocation4]
        $region16: #{gpsa_forward.6} parent=11 // pred_fallthru
          _
        // Predicated region
        $region17: #{gpsa_forward.6} parent=11 // pred_check
          %p156 = pneg %p105
        $region18: #{gpsa_forward.6} parent=11 // pred_check_branch
          %158 = sbr.rel (%p156) target = $region20
        $region19: #{gpsa_forward.6} parent=11 // pred_region
          _
        $region20: #{gpsa_forward.6} parent=11 // pred_fallthru
          _
      $region12: #{gpsa_forward.6} parent=5 // pred_fallthru
        _
      %p159 = scmp.lt.s32.totalorder %s11, 2
      // Predicated region
      $region21: #{gpsa_forward.6} parent=5 // pred_check
        %p160 = pneg %p159
      $region22: #{gpsa_forward.6} parent=5 // pred_check_branch
        %162 = sbr.rel (%p160) target = $region24
      $region23: #{gpsa_forward.6} parent=5 // pred_region
        // Predicated region
        $region25: #{gpsa_forward.6} parent=23 // pred_check
          %p163 = pneg %p52
        $region26: #{gpsa_forward.6} parent=23 // pred_check_branch
          %165 = sbr.rel (%p163) target = $region28
        $region27: #{gpsa_forward.6} parent=23 // pred_region
          %p166 = scmp.lt.s32.totalorder %s11, 1
          %s167 = scalar_select %p166, %s11, 1
          %s168 = smul.addr %s167, 2
          %s169 = smul.addr %s168, 8
          %s170 = scalar_lea.vmem %s1, %s169
        $region28: #{gpsa_forward.6} parent=23 // pred_fallthru
          _
        // Predicated region
        $region29: #{gpsa_forward.6} parent=23 // pred_check
          %p171 = pneg %p78
        $region30: #{gpsa_forward.6} parent=23 // pred_check_branch
          %173 = sbr.rel (%p171) target = $region32
        $region31: #{gpsa_forward.6} parent=23 // pred_region
          %p174 = scmp.lt.s32.totalorder %s11, 1
          %s175 = scalar_select %p174, %s11, 1
          %s176 = smul.addr %s175, 2
          %s177 = smul.addr %s176, 8
          %s178 = scalar_lea.vmem %s2, %s177
        $region32: #{gpsa_forward.6} parent=23 // pred_fallthru
          _
      $region24: #{gpsa_forward.6} parent=5 // pred_fallthru
        _
      %p179 = scmp.le.s32.totalorder 1, %s11
      %p180 = scmp.lt.s32.totalorder %s11, 3
      %p181 = pnand %p179, %p180
      %p182 = pneg %p181
      // Predicated region
      $region33: #{gpsa_forward.6} parent=5 // pred_check
        _
      $region34: #{gpsa_forward.6} parent=5 // pred_check_branch
        %184 = sbr.rel (%p181) target = $region36
      $region35: #{gpsa_forward.6} parent=5 // pred_region
        %s185 = ssub.s32 %s11, 1
        // Predicated region
        $region37: #{gpsa_forward.6} parent=35 // pred_check
          %p186 = pneg %p32
        $region38: #{gpsa_forward.6} parent=35 // pred_check_branch
          %188 = sbr.rel (%p186) target = $region40
        $region39: #{gpsa_forward.6} parent=35 // pred_region
          %190 = dma.done [#allocation4], 16
        $region40: #{gpsa_forward.6} parent=35 // pred_fallthru
          _
        %191 = sfence
        %p192 = pneg %p32
        %p193 = pneg %p29
        %p194 = scmp.lt.s32.totalorder %s16, 1
        %s195 = scalar_select %p194, %s16, 1
        %s196 = smul.addr %s195, 2
        %s197 = smul.addr %s196, 8
        %s198 = scalar_lea.vmem %s1, %s197
        %p199 = pneg %p58
        %p200 = pneg %p55
        %p201 = scmp.lt.s32.totalorder %s16, 1
        %s202 = scalar_select %p201, %s16, 1
        %s203 = smul.addr %s202, 2
        %s204 = smul.addr %s203, 8
        %s205 = scalar_lea.vmem %s2, %s204
        %p206 = pneg %p84
        %p207 = pneg %p81
        %p208 = pneg %p105
        %p209 = pneg %p102
        %p210 = pneg %p131
        %p211 = pneg %p128
        %p212 = scmp.lt.s32.totalorder %s16, 1
        %s213 = scalar_select %p212, %s16, 1
        %s214 = smul.addr %s213, 2
        %s215 = smul.addr %s214, 8
        %s216 = scalar_lea.vmem %s4, %s215
        %p217 = scmp.lt.s32.totalorder %s16, 1
        %s218 = scalar_select %p217, %s16, 1
        %s219 = smul.addr %s218, 2
        %s220 = smul.addr %s219, 8
        %s221 = scalar_lea.vmem %s1, %s220
        %p222 = scmp.lt.s32.totalorder %s16, 1
        %s223 = scalar_select %p222, %s16, 1
        %s224 = smul.addr %s223, 2
        %s225 = smul.addr %s224, 8
        %s226 = scalar_lea.vmem %s2, %s225
        %p227 = scmp.lt.s32.totalorder %s16, 1
        %s228 = scalar_select %p227, %s16, 1
        %s229 = smul.addr %s228, 2
        %s230 = smul.addr %s229, 8
        %s231 = scalar_lea.vmem %s4, %s230
        %v232 = vld [vmem:[%s221] sm:$0xff]
        %v233 = vld [vmem:[%s221 + $0x8] sm:$0xff]
        %v234 = vmul.f32 %v232, 0.35355338
        %v235 = vmul.f32 %v233, 0.35355338
        %v236 = vld [vmem:[%s226] sm:$0xff]
        %v237 = vld [vmem:[%s226 + $0x8] sm:$0xff]
        %240 = vrot.lane.b32.xlu0 %v232, 96
        %v241 = vpop.permute.xlu0 %240
        %242 = vrot.lane.b32.xlu0 %v233, 96
        %v243 = vpop.permute.xlu0 %242
        %vm244 = vcmask 64512
        %v246 = vsel %vm244, %v234, 0
        %v249 = vsel %vm244, %v235, 0
        %v251 = vsel %vm244, %v241, 0
        %v253 = vsel %vm244, %v243, 0
        %255 = vmatpush.xpose.msra.mxu0 0.0
        %256 = vmatpush.xpose.msra.mxu0 0.0
        %257 = vmatpush.xpose.msra.mxu0 0.0
        %258 = vmatpush.xpose.msra.mxu0 0.0
        %259 = vmatpush.xpose.msra.mxu0 0.0
        %260 = vmatpush.xpose.msra.mxu0 0.0
        %261 = vmatpush.xpose.msra.mxu0 0.0
        %262 = vmatpush.xpose.msra.mxu0 0.0
        %263 = vmatpush.xpose.msra.mxu0 0.0
        %264 = vmatpush.xpose.msra.mxu0 0.0
        %265 = vmatpush.xpose.msra.mxu0 0.0
        %266 = vmatpush.xpose.msra.mxu0 0.0
        %267 = vmatpush.xpose.msra.mxu0 0.0
        %268 = vmatpush.xpose.msra.mxu0 0.0
        %269 = vmatpush.xpose.msra.mxu0 %v253
        %270 = vmatpush.xpose.msra.mxu0 %v251
        %271 = vmatmul.f32.gmra.mxu0 %v246
        %v272 = vpop.f32.mrf.mxu0
        %v273 = vadd.f32 0.0, %v272
        %274 = vmatmul.f32.gmra.mxu0 %v249
        %v275 = vpop.f32.mrf.mxu0
        %v276 = vadd.f32 0.0, %v275
        %277 = vdwg.mxu0
        %vm278 = vcmask 130048
        %v279 = vsel %vm278, %v273, -inf
        %280 = vmax.xlane.f32.xlu0 %v279
        %v281 = vpop.xlane.xlu0 %280
        %v282 = vsel %vm278, %v276, -inf
        %283 = vmax.xlane.f32.xlu0 %v282
        %v284 = vpop.xlane.xlu0 %283
        %v285 = vsub.f32 %v273, %v281
        %v286 = vsub.f32 %v276, %v284
        %v287 = vmul.f32 %v285, 1.442695
        %v288 = vpow.pop %v287
        %v289 = vmul.f32 %v286, 1.442695
        %v290 = vpow.pop %v289
        %v291 = vsel %vm278, %v288, 0.0
        %292 = vadd.xlane.f32.xlu0 %v291
        %v293 = vpop.xlane.xlu0 %292
        %v294 = vsel %vm278, %v290, 0.0
        %295 = vadd.xlane.f32.xlu0 %v294
        %v296 = vpop.xlane.xlu0 %295
        %v297 = vrcp.pop %v293
        %v298 = vmul.f32 %v293, %v297
        %v299 = vsub.f32 1.0, %v298
        %v300 = vmul.f32 %v297, %v299
        %v301 = vadd.f32 %v297, %v300
        %vm302 = vweird.f32 %v293
        %vm303 = vweird.f32 %v297
        %vm304 = vmor %vm302, %vm303
        %v305 = vsel %vm304, %v297, %v301
        %v306 = vand.u32 2147483647, %v293
        %vm307 = vcmp.eq.f32.partialorder %v306, 8.507059e+37
        %v308 = vand.u32 %v293, 2147483648
        %v309 = vor.u32 1.1754944e-38, %v308
        %v310 = vsel %vm307, %v309, %v305
        %v311 = vmul.f32 1.0, %v310
        %v312 = vrcp.pop %v296
        %v313 = vmul.f32 %v296, %v312
        %v314 = vsub.f32 1.0, %v313
        %v315 = vmul.f32 %v312, %v314
        %v316 = vadd.f32 %v312, %v315
        %vm317 = vweird.f32 %v296
        %vm318 = vweird.f32 %v312
        %vm319 = vmor %vm317, %vm318
        %v320 = vsel %vm319, %v312, %v316
        %v321 = vand.u32 2147483647, %v296
        %vm322 = vcmp.eq.f32.partialorder %v321, 8.507059e+37
        %v323 = vand.u32 %v296, 2147483648
        %v324 = vor.u32 1.1754944e-38, %v323
        %v325 = vsel %vm322, %v324, %v320
        %v326 = vmul.f32 1.0, %v325
        %v327 = vmul.f32 %v288, %v311
        %v328 = vmul.f32 %v290, %v326
        %s329 = sld [smem:[#allocation3]]
        %s330 = ssub.f32 1.0, %s329
        %v331 = vstv %s330
        %v332 = vmul.f32 %v331, %v327
        %v333 = vmul.f32 %v331, %v328
        %v334 = vld [vmem:[%s3] sm:$0xff]
        %v335 = vld [vmem:[%s3 + $0x8] sm:$0xff]
        %v336 = vstv %s329
        %v337 = vmul.f32 %v336, %v334
        %v338 = vmul.f32 %v336, %v335
        %v339 = vadd.f32 %v332, %v337
        %v340 = vadd.f32 %v333, %v338
        %v341 = vsel %vm278, %v339, 0.0
        %342 = vadd.xlane.f32.xlu0 %v341
        %v343 = vpop.xlane.xlu0 %342
        %v344 = vsel %vm278, %v340, 0.0
        %345 = vadd.xlane.f32.xlu0 %v344
        %v346 = vpop.xlane.xlu0 %345
        %v347 = vrcp.pop %v343
        %v348 = vmul.f32 %v343, %v347
        %v349 = vsub.f32 1.0, %v348
        %v350 = vmul.f32 %v347, %v349
        %v351 = vadd.f32 %v347, %v350
        %vm352 = vweird.f32 %v343
        %vm353 = vweird.f32 %v347
        %vm354 = vmor %vm352, %vm353
        %v355 = vsel %vm354, %v347, %v351
        %v356 = vand.u32 2147483647, %v343
        %vm357 = vcmp.eq.f32.partialorder %v356, 8.507059e+37
        %v358 = vand.u32 %v343, 2147483648
        %v359 = vor.u32 1.1754944e-38, %v358
        %v360 = vsel %vm357, %v359, %v355
        %v361 = vmul.f32 1.0, %v360
        %v362 = vrcp.pop %v346
        %v363 = vmul.f32 %v346, %v362
        %v364 = vsub.f32 1.0, %v363
        %v365 = vmul.f32 %v362, %v364
        %v366 = vadd.f32 %v362, %v365
        %vm367 = vweird.f32 %v346
        %vm368 = vweird.f32 %v362
        %vm369 = vmor %vm367, %vm368
        %v370 = vsel %vm369, %v362, %v366
        %v371 = vand.u32 2147483647, %v346
        %vm372 = vcmp.eq.f32.partialorder %v371, 8.507059e+37
        %v373 = vand.u32 %v346, 2147483648
        %v374 = vor.u32 1.1754944e-38, %v373
        %v375 = vsel %vm372, %v374, %v370
        %v376 = vmul.f32 1.0, %v375
        %v377 = vmul.f32 %v339, %v361
        %v378 = vmul.f32 %v340, %v376
        %v380 = vsel %vm278, %v377, 0
        %v383 = vsel %vm278, %v378, 0
        %385 = vmatpush.msra.mxu0 0.0
        %386 = vmatpush.msra.mxu0 0.0
        %387 = vmatpush.msra.mxu0 0.0
        %388 = vmatpush.msra.mxu0 0.0
        %389 = vmatpush.msra.mxu0 0.0
        %390 = vmatpush.msra.mxu0 0.0
        %391 = vmatpush.msra.mxu0 0.0
        %392 = vmatpush.msra.mxu0 0.0
        %393 = vmatpush.msra.mxu0 0.0
        %394 = vmatpush.msra.mxu0 0.0
        %395 = vmatpush.msra.mxu0 0.0
        %396 = vmatpush.msra.mxu0 0.0
        %397 = vmatpush.msra.mxu0 0.0
        %398 = vmatpush.msra.mxu0 0.0
        %399 = vmatpush.msra.mxu0 %v237
        %400 = vmatpush.msra.mxu0 %v236
        %401 = vmatmul.f32.gmra.mxu0 %v380
        %v402 = vpop.f32.mrf.mxu0
        %v403 = vadd.f32 0.0, %v402
        %404 = vmatmul.f32.gmra.mxu0 %v383
        %v405 = vpop.f32.mrf.mxu0
        %v406 = vadd.f32 0.0, %v405
        %407 = vdwg.mxu0
        %408 = vst.msk [vmem:[#allocation2] sm:$0xff] %vm244, %v403
        %409 = vst.msk [vmem:[#allocation2 + $0x8] sm:$0xff] %vm244, %v406
        %v410 = vld [vmem:[%s221] sm:$0xff]
        %v411 = vld [vmem:[%s221 + $0x8] sm:$0xff]
        %v412 = vmul.f32 %v410, 0.35355338
        %v413 = vmul.f32 %v411, 0.35355338
        %v414 = vld [vmem:[%s226] sm:$0xff]
        %v415 = vld [vmem:[%s226 + $0x8] sm:$0xff]
        %418 = vrot.lane.b32.xlu0 %v412, 120
        %v419 = vpop.permute.xlu0 %418
        %420 = vrot.lane.b32.xlu0 %v413, 120
        %v421 = vpop.permute.xlu0 %420
        %424 = vrot.lane.b32.xlu0 %v410, 88
        %v425 = vpop.permute.xlu0 %424
        %426 = vrot.lane.b32.xlu0 %v411, 88
        %v427 = vpop.permute.xlu0 %426
        %v428 = vsel %vm244, %v419, 0
        %v430 = vsel %vm244, %v421, 0
        %v432 = vsel %vm244, %v425, 0
        %v434 = vsel %vm244, %v427, 0
        %436 = vmatpush.xpose.msra.mxu0 0.0
        %437 = vmatpush.xpose.msra.mxu0 0.0
        %438 = vmatpush.xpose.msra.mxu0 0.0
        %439 = vmatpush.xpose.msra.mxu0 0.0
        %440 = vmatpush.xpose.msra.mxu0 0.0
        %441 = vmatpush.xpose.msra.mxu0 0.0
        %442 = vmatpush.xpose.msra.mxu0 0.0
        %443 = vmatpush.xpose.msra.mxu0 0.0
        %444 = vmatpush.xpose.msra.mxu0 0.0
        %445 = vmatpush.xpose.msra.mxu0 0.0
        %446 = vmatpush.xpose.msra.mxu0 0.0
        %447 = vmatpush.xpose.msra.mxu0 0.0
        %448 = vmatpush.xpose.msra.mxu0 0.0
        %449 = vmatpush.xpose.msra.mxu0 0.0
        %450 = vmatpush.xpose.msra.mxu0 %v434
        %451 = vmatpush.xpose.msra.mxu0 %v432
        %452 = vmatmul.f32.gmra.mxu0 %v428
        %v453 = vpop.f32.mrf.mxu0
        %v454 = vadd.f32 0.0, %v453
        %455 = vmatmul.f32.gmra.mxu0 %v430
        %v456 = vpop.f32.mrf.mxu0
        %v457 = vadd.f32 0.0, %v456
        %458 = vdwg.mxu0
        %v459 = vsel %vm278, %v454, -inf
        %460 = vmax.xlane.f32.xlu0 %v459
        %v461 = vpop.xlane.xlu0 %460
        %v462 = vsel %vm278, %v457, -inf
        %463 = vmax.xlane.f32.xlu0 %v462
        %v464 = vpop.xlane.xlu0 %463
        %v465 = vsub.f32 %v454, %v461
        %v466 = vsub.f32 %v457, %v464
        %v467 = vmul.f32 %v465, 1.442695
        %v468 = vpow.pop %v467
        %v469 = vmul.f32 %v466, 1.442695
        %v470 = vpow.pop %v469
        %v471 = vsel %vm278, %v468, 0.0
        %472 = vadd.xlane.f32.xlu0 %v471
        %v473 = vpop.xlane.xlu0 %472
        %v474 = vsel %vm278, %v470, 0.0
        %475 = vadd.xlane.f32.xlu0 %v474
        %v476 = vpop.xlane.xlu0 %475
        %v477 = vrcp.pop %v473
        %v478 = vmul.f32 %v473, %v477
        %v479 = vsub.f32 1.0, %v478
        %v480 = vmul.f32 %v477, %v479
        %v481 = vadd.f32 %v477, %v480
        %vm482 = vweird.f32 %v473
        %vm483 = vweird.f32 %v477
        %vm484 = vmor %vm482, %vm483
        %v485 = vsel %vm484, %v477, %v481
        %v486 = vand.u32 2147483647, %v473
        %vm487 = vcmp.eq.f32.partialorder %v486, 8.507059e+37
        %v488 = vand.u32 %v473, 2147483648
        %v489 = vor.u32 1.1754944e-38, %v488
        %v490 = vsel %vm487, %v489, %v485
        %v491 = vmul.f32 1.0, %v490
        %v492 = vrcp.pop %v476
        %v493 = vmul.f32 %v476, %v492
        %v494 = vsub.f32 1.0, %v493
        %v495 = vmul.f32 %v492, %v494
        %v496 = vadd.f32 %v492, %v495
        %vm497 = vweird.f32 %v476
        %vm498 = vweird.f32 %v492
        %vm499 = vmor %vm497, %vm498
        %v500 = vsel %vm499, %v492, %v496
        %v501 = vand.u32 2147483647, %v476
        %vm502 = vcmp.eq.f32.partialorder %v501, 8.507059e+37
        %v503 = vand.u32 %v476, 2147483648
        %v504 = vor.u32 1.1754944e-38, %v503
        %v505 = vsel %vm502, %v504, %v500
        %v506 = vmul.f32 1.0, %v505
        %v507 = vmul.f32 %v468, %v491
        %v508 = vmul.f32 %v470, %v506
        %s509 = sld [smem:[#allocation3 + $0x1]]
        %s510 = ssub.f32 1.0, %s509
        %v511 = vstv %s510
        %v512 = vmul.f32 %v511, %v507
        %v513 = vmul.f32 %v511, %v508
        %s514 = scalar_lea.vmem %s3, 16
        %v515 = vld [vmem:[%s514] sm:$0xff]
        %v516 = vld [vmem:[%s514 + $0x8] sm:$0xff]
        %v517 = vstv %s509
        %v518 = vmul.f32 %v517, %v515
        %v519 = vmul.f32 %v517, %v516
        %v520 = vadd.f32 %v512, %v518
        %v521 = vadd.f32 %v513, %v519
        %v522 = vsel %vm278, %v520, 0.0
        %523 = vadd.xlane.f32.xlu0 %v522
        %v524 = vpop.xlane.xlu0 %523
        %v525 = vsel %vm278, %v521, 0.0
        %526 = vadd.xlane.f32.xlu0 %v525
        %v527 = vpop.xlane.xlu0 %526
        %v528 = vrcp.pop %v524
        %v529 = vmul.f32 %v524, %v528
        %v530 = vsub.f32 1.0, %v529
        %v531 = vmul.f32 %v528, %v530
        %v532 = vadd.f32 %v528, %v531
        %vm533 = vweird.f32 %v524
        %vm534 = vweird.f32 %v528
        %vm535 = vmor %vm533, %vm534
        %v536 = vsel %vm535, %v528, %v532
        %v537 = vand.u32 2147483647, %v524
        %vm538 = vcmp.eq.f32.partialorder %v537, 8.507059e+37
        %v539 = vand.u32 %v524, 2147483648
        %v540 = vor.u32 1.1754944e-38, %v539
        %v541 = vsel %vm538, %v540, %v536
        %v542 = vmul.f32 1.0, %v541
        %v543 = vrcp.pop %v527
        %v544 = vmul.f32 %v527, %v543
        %v545 = vsub.f32 1.0, %v544
        %v546 = vmul.f32 %v543, %v545
        %v547 = vadd.f32 %v543, %v546
        %vm548 = vweird.f32 %v527
        %vm549 = vweird.f32 %v543
        %vm550 = vmor %vm548, %vm549
        %v551 = vsel %vm550, %v543, %v547
        %v552 = vand.u32 2147483647, %v527
        %vm553 = vcmp.eq.f32.partialorder %v552, 8.507059e+37
        %v554 = vand.u32 %v527, 2147483648
        %v555 = vor.u32 1.1754944e-38, %v554
        %v556 = vsel %vm553, %v555, %v551
        %v557 = vmul.f32 1.0, %v556
        %v558 = vmul.f32 %v520, %v542
        %v559 = vmul.f32 %v521, %v557
        %562 = vrot.lane.b32.xlu0 %v414, 120
        %v563 = vpop.permute.xlu0 %562
        %564 = vrot.lane.b32.xlu0 %v415, 120
        %v565 = vpop.permute.xlu0 %564
        %v569 = vsel %vm278, %v558, 0
        %v572 = vsel %vm278, %v559, 0
        %574 = vmatpush.msra.mxu0 0.0
        %575 = vmatpush.msra.mxu0 0.0
        %576 = vmatpush.msra.mxu0 0.0
        %577 = vmatpush.msra.mxu0 0.0
        %578 = vmatpush.msra.mxu0 0.0
        %579 = vmatpush.msra.mxu0 0.0
        %580 = vmatpush.msra.mxu0 0.0
        %581 = vmatpush.msra.mxu0 0.0
        %582 = vmatpush.msra.mxu0 0.0
        %583 = vmatpush.msra.mxu0 0.0
        %584 = vmatpush.msra.mxu0 0.0
        %585 = vmatpush.msra.mxu0 0.0
        %586 = vmatpush.msra.mxu0 0.0
        %587 = vmatpush.msra.mxu0 0.0
        %588 = vmatpush.msra.mxu0 %v565
        %589 = vmatpush.msra.mxu0 %v563
        %590 = vmatmul.f32.gmra.mxu0 %v569
        %v591 = vpop.f32.mrf.mxu0
        %v592 = vadd.f32 0.0, %v591
        %593 = vmatmul.f32.gmra.mxu0 %v572
        %v594 = vpop.f32.mrf.mxu0
        %v595 = vadd.f32 0.0, %v594
        %596 = vdwg.mxu0
        %599 = vrot.lane.b32.xlu0 %v592, 8
        %v600 = vpop.permute.xlu0 %599
        %601 = vrot.lane.b32.xlu0 %v595, 8
        %v602 = vpop.permute.xlu0 %601
        %vm605 = vcmask 130112
        %606 = vst.msk [vmem:[#allocation2] sm:$0xff] %vm605, %v600
        %607 = vst.msk [vmem:[#allocation2 + $0x8] sm:$0xff] %vm605, %v602
        %v608 = vld [vmem:[%s221] sm:$0xff]
        %v609 = vld [vmem:[%s221 + $0x8] sm:$0xff]
        %v610 = vmul.f32 %v608, 0.35355338
        %v611 = vmul.f32 %v609, 0.35355338
        %v612 = vld [vmem:[%s226] sm:$0xff]
        %v613 = vld [vmem:[%s226 + $0x8] sm:$0xff]
        %616 = vrot.lane.b32.xlu0 %v610, 112
        %v617 = vpop.permute.xlu0 %616
        %618 = vrot.lane.b32.xlu0 %v611, 112
        %v619 = vpop.permute.xlu0 %618
        %622 = vrot.lane.b32.xlu0 %v608, 80
        %v623 = vpop.permute.xlu0 %622
        %624 = vrot.lane.b32.xlu0 %v609, 80
        %v625 = vpop.permute.xlu0 %624
        %v626 = vsel %vm244, %v617, 0
        %v628 = vsel %vm244, %v619, 0
        %v630 = vsel %vm244, %v623, 0
        %v632 = vsel %vm244, %v625, 0
        %634 = vmatpush.xpose.msra.mxu0 0.0
        %635 = vmatpush.xpose.msra.mxu0 0.0
        %636 = vmatpush.xpose.msra.mxu0 0.0
        %637 = vmatpush.xpose.msra.mxu0 0.0
        %638 = vmatpush.xpose.msra.mxu0 0.0
        %639 = vmatpush.xpose.msra.mxu0 0.0
        %640 = vmatpush.xpose.msra.mxu0 0.0
        %641 = vmatpush.xpose.msra.mxu0 0.0
        %642 = vmatpush.xpose.msra.mxu0 0.0
        %643 = vmatpush.xpose.msra.mxu0 0.0
        %644 = vmatpush.xpose.msra.mxu0 0.0
        %645 = vmatpush.xpose.msra.mxu0 0.0
        %646 = vmatpush.xpose.msra.mxu0 0.0
        %647 = vmatpush.xpose.msra.mxu0 0.0
        %648 = vmatpush.xpose.msra.mxu0 %v632
        %649 = vmatpush.xpose.msra.mxu0 %v630
        %650 = vmatmul.f32.gmra.mxu0 %v626
        %v651 = vpop.f32.mrf.mxu0
        %v652 = vadd.f32 0.0, %v651
        %653 = vmatmul.f32.gmra.mxu0 %v628
        %v654 = vpop.f32.mrf.mxu0
        %v655 = vadd.f32 0.0, %v654
        %656 = vdwg.mxu0
        %v657 = vsel %vm278, %v652, -inf
        %658 = vmax.xlane.f32.xlu0 %v657
        %v659 = vpop.xlane.xlu0 %658
        %v660 = vsel %vm278, %v655, -inf
        %661 = vmax.xlane.f32.xlu0 %v660
        %v662 = vpop.xlane.xlu0 %661
        %v663 = vsub.f32 %v652, %v659
        %v664 = vsub.f32 %v655, %v662
        %v665 = vmul.f32 %v663, 1.442695
        %v666 = vpow.pop %v665
        %v667 = vmul.f32 %v664, 1.442695
        %v668 = vpow.pop %v667
        %v669 = vsel %vm278, %v666, 0.0
        %670 = vadd.xlane.f32.xlu0 %v669
        %v671 = vpop.xlane.xlu0 %670
        %v672 = vsel %vm278, %v668, 0.0
        %673 = vadd.xlane.f32.xlu0 %v672
        %v674 = vpop.xlane.xlu0 %673
        %v675 = vrcp.pop %v671
        %v676 = vmul.f32 %v671, %v675
        %v677 = vsub.f32 1.0, %v676
        %v678 = vmul.f32 %v675, %v677
        %v679 = vadd.f32 %v675, %v678
        %vm680 = vweird.f32 %v671
        %vm681 = vweird.f32 %v675
        %vm682 = vmor %vm680, %vm681
        %v683 = vsel %vm682, %v675, %v679
        %v684 = vand.u32 2147483647, %v671
        %vm685 = vcmp.eq.f32.partialorder %v684, 8.507059e+37
        %v686 = vand.u32 %v671, 2147483648
        %v687 = vor.u32 1.1754944e-38, %v686
        %v688 = vsel %vm685, %v687, %v683
        %v689 = vmul.f32 1.0, %v688
        %v690 = vrcp.pop %v674
        %v691 = vmul.f32 %v674, %v690
        %v692 = vsub.f32 1.0, %v691
        %v693 = vmul.f32 %v690, %v692
        %v694 = vadd.f32 %v690, %v693
        %vm695 = vweird.f32 %v674
        %vm696 = vweird.f32 %v690
        %vm697 = vmor %vm695, %vm696
        %v698 = vsel %vm697, %v690, %v694
        %v699 = vand.u32 2147483647, %v674
        %vm700 = vcmp.eq.f32.partialorder %v699, 8.507059e+37
        %v701 = vand.u32 %v674, 2147483648
        %v702 = vor.u32 1.1754944e-38, %v701
        %v703 = vsel %vm700, %v702, %v698
        %v704 = vmul.f32 1.0, %v703
        %v705 = vmul.f32 %v666, %v689
        %v706 = vmul.f32 %v668, %v704
        %s707 = sld [smem:[#allocation3 + $0x2]]
        %s708 = ssub.f32 1.0, %s707
        %v709 = vstv %s708
        %v710 = vmul.f32 %v709, %v705
        %v711 = vmul.f32 %v709, %v706
        %s712 = scalar_lea.vmem %s3, 32
        %v713 = vld [vmem:[%s712] sm:$0xff]
        %v714 = vld [vmem:[%s712 + $0x8] sm:$0xff]
        %v715 = vstv %s707
        %v716 = vmul.f32 %v715, %v713
        %v717 = vmul.f32 %v715, %v714
        %v718 = vadd.f32 %v710, %v716
        %v719 = vadd.f32 %v711, %v717
        %v720 = vsel %vm278, %v718, 0.0
        %721 = vadd.xlane.f32.xlu0 %v720
        %v722 = vpop.xlane.xlu0 %721
        %v723 = vsel %vm278, %v719, 0.0
        %724 = vadd.xlane.f32.xlu0 %v723
        %v725 = vpop.xlane.xlu0 %724
        %v726 = vrcp.pop %v722
        %v727 = vmul.f32 %v722, %v726
        %v728 = vsub.f32 1.0, %v727
        %v729 = vmul.f32 %v726, %v728
        %v730 = vadd.f32 %v726, %v729
        %vm731 = vweird.f32 %v722
        %vm732 = vweird.f32 %v726
        %vm733 = vmor %vm731, %vm732
        %v734 = vsel %vm733, %v726, %v730
        %v735 = vand.u32 2147483647, %v722
        %vm736 = vcmp.eq.f32.partialorder %v735, 8.507059e+37
        %v737 = vand.u32 %v722, 2147483648
        %v738 = vor.u32 1.1754944e-38, %v737
        %v739 = vsel %vm736, %v738, %v734
        %v740 = vmul.f32 1.0, %v739
        %v741 = vrcp.pop %v725
        %v742 = vmul.f32 %v725, %v741
        %v743 = vsub.f32 1.0, %v742
        %v744 = vmul.f32 %v741, %v743
        %v745 = vadd.f32 %v741, %v744
        %vm746 = vweird.f32 %v725
        %vm747 = vweird.f32 %v741
        %vm748 = vmor %vm746, %vm747
        %v749 = vsel %vm748, %v741, %v745
        %v750 = vand.u32 2147483647, %v725
        %vm751 = vcmp.eq.f32.partialorder %v750, 8.507059e+37
        %v752 = vand.u32 %v725, 2147483648
        %v753 = vor.u32 1.1754944e-38, %v752
        %v754 = vsel %vm751, %v753, %v749
        %v755 = vmul.f32 1.0, %v754
        %v756 = vmul.f32 %v718, %v740
        %v757 = vmul.f32 %v719, %v755
        %760 = vrot.lane.b32.xlu0 %v612, 112
        %v761 = vpop.permute.xlu0 %760
        %762 = vrot.lane.b32.xlu0 %v613, 112
        %v763 = vpop.permute.xlu0 %762
        %v767 = vsel %vm278, %v756, 0
        %v770 = vsel %vm278, %v757, 0
        %772 = vmatpush.msra.mxu0 0.0
        %773 = vmatpush.msra.mxu0 0.0
        %774 = vmatpush.msra.mxu0 0.0
        %775 = vmatpush.msra.mxu0 0.0
        %776 = vmatpush.msra.mxu0 0.0
        %777 = vmatpush.msra.mxu0 0.0
        %778 = vmatpush.msra.mxu0 0.0
        %779 = vmatpush.msra.mxu0 0.0
        %780 = vmatpush.msra.mxu0 0.0
        %781 = vmatpush.msra.mxu0 0.0
        %782 = vmatpush.msra.mxu0 0.0
        %783 = vmatpush.msra.mxu0 0.0
        %784 = vmatpush.msra.mxu0 0.0
        %785 = vmatpush.msra.mxu0 0.0
        %786 = vmatpush.msra.mxu0 %v763
        %787 = vmatpush.msra.mxu0 %v761
        %788 = vmatmul.f32.gmra.mxu0 %v767
        %v789 = vpop.f32.mrf.mxu0
        %v790 = vadd.f32 0.0, %v789
        %791 = vmatmul.f32.gmra.mxu0 %v770
        %v792 = vpop.f32.mrf.mxu0
        %v793 = vadd.f32 0.0, %v792
        %794 = vdwg.mxu0
        %797 = vrot.lane.b32.xlu0 %v790, 16
        %v798 = vpop.permute.xlu0 %797
        %799 = vrot.lane.b32.xlu0 %v793, 16
        %v800 = vpop.permute.xlu0 %799
        %vm803 = vcmask 195712
        %804 = vst.msk [vmem:[#allocation2] sm:$0xff] %vm803, %v798
        %805 = vst.msk [vmem:[#allocation2 + $0x8] sm:$0xff] %vm803, %v800
        %v806 = vld [vmem:[%s221] sm:$0xff]
        %v807 = vld [vmem:[%s221 + $0x8] sm:$0xff]
        %v808 = vmul.f32 %v806, 0.35355338
        %v809 = vmul.f32 %v807, 0.35355338
        %v810 = vld [vmem:[%s226] sm:$0xff]
        %v811 = vld [vmem:[%s226 + $0x8] sm:$0xff]
        %814 = vrot.lane.b32.xlu0 %v808, 104
        %v815 = vpop.permute.xlu0 %814
        %816 = vrot.lane.b32.xlu0 %v809, 104
        %v817 = vpop.permute.xlu0 %816
        %820 = vrot.lane.b32.xlu0 %v806, 72
        %v821 = vpop.permute.xlu0 %820
        %822 = vrot.lane.b32.xlu0 %v807, 72
        %v823 = vpop.permute.xlu0 %822
        %v824 = vsel %vm244, %v815, 0
        %v826 = vsel %vm244, %v817, 0
        %v828 = vsel %vm244, %v821, 0
        %v830 = vsel %vm244, %v823, 0
        %832 = vmatpush.xpose.msra.mxu0 0.0
        %833 = vmatpush.xpose.msra.mxu0 0.0
        %834 = vmatpush.xpose.msra.mxu0 0.0
        %835 = vmatpush.xpose.msra.mxu0 0.0
        %836 = vmatpush.xpose.msra.mxu0 0.0
        %837 = vmatpush.xpose.msra.mxu0 0.0
        %838 = vmatpush.xpose.msra.mxu0 0.0
        %839 = vmatpush.xpose.msra.mxu0 0.0
        %840 = vmatpush.xpose.msra.mxu0 0.0
        %841 = vmatpush.xpose.msra.mxu0 0.0
        %842 = vmatpush.xpose.msra.mxu0 0.0
        %843 = vmatpush.xpose.msra.mxu0 0.0
        %844 = vmatpush.xpose.msra.mxu0 0.0
        %845 = vmatpush.xpose.msra.mxu0 0.0
        %846 = vmatpush.xpose.msra.mxu0 %v830
        %847 = vmatpush.xpose.msra.mxu0 %v828
        %848 = vmatmul.f32.gmra.mxu0 %v824
        %v849 = vpop.f32.mrf.mxu0
        %v850 = vadd.f32 0.0, %v849
        %851 = vmatmul.f32.gmra.mxu0 %v826
        %v852 = vpop.f32.mrf.mxu0
        %v853 = vadd.f32 0.0, %v852
        %854 = vdwg.mxu0
        %v855 = vsel %vm278, %v850, -inf
        %856 = vmax.xlane.f32.xlu0 %v855
        %v857 = vpop.xlane.xlu0 %856
        %v858 = vsel %vm278, %v853, -inf
        %859 = vmax.xlane.f32.xlu0 %v858
        %v860 = vpop.xlane.xlu0 %859
        %v861 = vsub.f32 %v850, %v857
        %v862 = vsub.f32 %v853, %v860
        %v863 = vmul.f32 %v861, 1.442695
        %v864 = vpow.pop %v863
        %v865 = vmul.f32 %v862, 1.442695
        %v866 = vpow.pop %v865
        %v867 = vsel %vm278, %v864, 0.0
        %868 = vadd.xlane.f32.xlu0 %v867
        %v869 = vpop.xlane.xlu0 %868
        %v870 = vsel %vm278, %v866, 0.0
        %871 = vadd.xlane.f32.xlu0 %v870
        %v872 = vpop.xlane.xlu0 %871
        %v873 = vrcp.pop %v869
        %v874 = vmul.f32 %v869, %v873
        %v875 = vsub.f32 1.0, %v874
        %v876 = vmul.f32 %v873, %v875
        %v877 = vadd.f32 %v873, %v876
        %vm878 = vweird.f32 %v869
        %vm879 = vweird.f32 %v873
        %vm880 = vmor %vm878, %vm879
        %v881 = vsel %vm880, %v873, %v877
        %v882 = vand.u32 2147483647, %v869
        %vm883 = vcmp.eq.f32.partialorder %v882, 8.507059e+37
        %v884 = vand.u32 %v869, 2147483648
        %v885 = vor.u32 1.1754944e-38, %v884
        %v886 = vsel %vm883, %v885, %v881
        %v887 = vmul.f32 1.0, %v886
        %v888 = vrcp.pop %v872
        %v889 = vmul.f32 %v872, %v888
        %v890 = vsub.f32 1.0, %v889
        %v891 = vmul.f32 %v888, %v890
        %v892 = vadd.f32 %v888, %v891
        %vm893 = vweird.f32 %v872
        %vm894 = vweird.f32 %v888
        %vm895 = vmor %vm893, %vm894
        %v896 = vsel %vm895, %v888, %v892
        %v897 = vand.u32 2147483647, %v872
        %vm898 = vcmp.eq.f32.partialorder %v897, 8.507059e+37
        %v899 = vand.u32 %v872, 2147483648
        %v900 = vor.u32 1.1754944e-38, %v899
        %v901 = vsel %vm898, %v900, %v896
        %v902 = vmul.f32 1.0, %v901
        %v903 = vmul.f32 %v864, %v887
        %v904 = vmul.f32 %v866, %v902
        %s905 = sld [smem:[#allocation3 + $0x3]]
        %s906 = ssub.f32 1.0, %s905
        %v907 = vstv %s906
        %v908 = vmul.f32 %v907, %v903
        %v909 = vmul.f32 %v907, %v904
        %s910 = scalar_lea.vmem %s3, 48
        %v911 = vld [vmem:[%s910] sm:$0xff]
        %v912 = vld [vmem:[%s910 + $0x8] sm:$0xff]
        %v913 = vstv %s905
        %v914 = vmul.f32 %v913, %v911
        %v915 = vmul.f32 %v913, %v912
        %v916 = vadd.f32 %v908, %v914
        %v917 = vadd.f32 %v909, %v915
        %v918 = vsel %vm278, %v916, 0.0
        %919 = vadd.xlane.f32.xlu0 %v918
        %v920 = vpop.xlane.xlu0 %919
        %v921 = vsel %vm278, %v917, 0.0
        %922 = vadd.xlane.f32.xlu0 %v921
        %v923 = vpop.xlane.xlu0 %922
        %v924 = vrcp.pop %v920
        %v925 = vmul.f32 %v920, %v924
        %v926 = vsub.f32 1.0, %v925
        %v927 = vmul.f32 %v924, %v926
        %v928 = vadd.f32 %v924, %v927
        %vm929 = vweird.f32 %v920
        %vm930 = vweird.f32 %v924
        %vm931 = vmor %vm929, %vm930
        %v932 = vsel %vm931, %v924, %v928
        %v933 = vand.u32 2147483647, %v920
        %vm934 = vcmp.eq.f32.partialorder %v933, 8.507059e+37
        %v935 = vand.u32 %v920, 2147483648
        %v936 = vor.u32 1.1754944e-38, %v935
        %v937 = vsel %vm934, %v936, %v932
        %v938 = vmul.f32 1.0, %v937
        %v939 = vrcp.pop %v923
        %v940 = vmul.f32 %v923, %v939
        %v941 = vsub.f32 1.0, %v940
        %v942 = vmul.f32 %v939, %v941
        %v943 = vadd.f32 %v939, %v942
        %vm944 = vweird.f32 %v923
        %vm945 = vweird.f32 %v939
        %vm946 = vmor %vm944, %vm945
        %v947 = vsel %vm946, %v939, %v943
        %v948 = vand.u32 2147483647, %v923
        %vm949 = vcmp.eq.f32.partialorder %v948, 8.507059e+37
        %v950 = vand.u32 %v923, 2147483648
        %v951 = vor.u32 1.1754944e-38, %v950
        %v952 = vsel %vm949, %v951, %v947
        %v953 = vmul.f32 1.0, %v952
        %v954 = vmul.f32 %v916, %v938
        %v955 = vmul.f32 %v917, %v953
        %958 = vrot.lane.b32.xlu0 %v810, 104
        %v959 = vpop.permute.xlu0 %958
        %960 = vrot.lane.b32.xlu0 %v811, 104
        %v961 = vpop.permute.xlu0 %960
        %v965 = vsel %vm278, %v954, 0
        %v968 = vsel %vm278, %v955, 0
        %970 = vmatpush.msra.mxu0 0.0
        %971 = vmatpush.msra.mxu0 0.0
        %972 = vmatpush.msra.mxu0 0.0
        %973 = vmatpush.msra.mxu0 0.0
        %974 = vmatpush.msra.mxu0 0.0
        %975 = vmatpush.msra.mxu0 0.0
        %976 = vmatpush.msra.mxu0 0.0
        %977 = vmatpush.msra.mxu0 0.0
        %978 = vmatpush.msra.mxu0 0.0
        %979 = vmatpush.msra.mxu0 0.0
        %980 = vmatpush.msra.mxu0 0.0
        %981 = vmatpush.msra.mxu0 0.0
        %982 = vmatpush.msra.mxu0 0.0
        %983 = vmatpush.msra.mxu0 0.0
        %984 = vmatpush.msra.mxu0 %v961
        %985 = vmatpush.msra.mxu0 %v959
        %986 = vmatmul.f32.gmra.mxu0 %v965
        %v987 = vpop.f32.mrf.mxu0
        %v988 = vadd.f32 0.0, %v987
        %989 = vmatmul.f32.gmra.mxu0 %v968
        %v990 = vpop.f32.mrf.mxu0
        %v991 = vadd.f32 0.0, %v990
        %992 = vdwg.mxu0
        %995 = vrot.lane.b32.xlu0 %v988, 24
        %v996 = vpop.permute.xlu0 %995
        %997 = vrot.lane.b32.xlu0 %v991, 24
        %v998 = vpop.permute.xlu0 %997
        %vm1001 = vcmask 261312
        %1002 = vst.msk [vmem:[#allocation2] sm:$0xff] %vm1001, %v996
        %1003 = vst.msk [vmem:[#allocation2 + $0x8] sm:$0xff] %vm1001, %v998
        %v1004 = vld [vmem:[#allocation2] sm:$0xff]
        %v1005 = vld [vmem:[#allocation2 + $0x8] sm:$0xff]
        %vm1006 = vcmask 261120
        %1007 = vst.msk [vmem:[%s231] sm:$0xff] %vm1006, %v1004
        %1008 = vst.msk [vmem:[%s231 + $0x8] sm:$0xff] %vm1006, %v1005
        %p1009 = scmp.lt.s32.totalorder %s16, 1
        %s1010 = scalar_select %p1009, %s16, 1
        %s1011 = smul.addr %s1010, 2
        %s1012 = smul.addr %s1011, 8
        %s1013 = scalar_lea.vmem %s4, %s1012
        // Predicated region
        $region41: #{gpsa_forward.6} parent=35 // pred_check
          %p1014 = pneg %p128
        $region42: #{gpsa_forward.6} parent=35 // pred_check_branch
          %1016 = sbr.rel (%p1014) target = $region44
        $region43: #{gpsa_forward.6} parent=35 // pred_region
          _
        $region44: #{gpsa_forward.6} parent=35 // pred_fallthru
          _
      $region36: #{gpsa_forward.6} parent=5 // pred_fallthru
        _
      %p1017 = scmp.le.s32.totalorder 2, %s11
      // Predicated region
      $region45: #{gpsa_forward.6} parent=5 // pred_check
        %p1018 = pneg %p1017
      $region46: #{gpsa_forward.6} parent=5 // pred_check_branch
        %1020 = sbr.rel (%p1018) target = $region48
      $region47: #{gpsa_forward.6} parent=5 // pred_region
        %s1021 = ssub.s32 %s11, 2
        // Predicated region
        $region49: #{gpsa_forward.6} parent=47 // pred_check
          %p1022 = pneg %p134
        $region50: #{gpsa_forward.6} parent=47 // pred_check_branch
          %1024 = sbr.rel (%p1022) target = $region52
        $region51: #{gpsa_forward.6} parent=47 // pred_region
          %p1025 = scmp.lt.s32.totalorder %s17, 1
          %s1026 = scalar_select %p1025, %s17, 1
          %s1027 = smul.addr %s1026, 2
          %s1028 = smul.addr %s1027, 8
          %s1029 = scalar_lea.vmem %s4, %s1028
        $region52: #{gpsa_forward.6} parent=47 // pred_fallthru
          _
      $region48: #{gpsa_forward.6} parent=5 // pred_fallthru
        _
    $region6: #{gpsa_forward.6} parent=1 // loop_footer
      %s15 = sadd.s32 1, %s11
    $region7: #{gpsa_forward.6} parent=1 // loop_footer_branch
      %10 = sbr.rel target = $region3
    $region8: #{gpsa_forward.6} parent=1 // loop_exit
      _
    %1030 = vsyncpa [#allocation4], 1
    %s1031 = scalar_lea.sflag [#allocation4], 1
    %1032 = vsyncpa %s1031, 1

</llo_original>
